<compile_context>
chip_gen: v7x
topology: tpu7x:2x2x1
jax: 0.10.0
libtpu: 0.0.40
codegen_flags: <defaults>
</compile_context>

<pallas_src>
import functools

import jax
import jax.numpy as jnp
from jax.experimental import pallas as pl
from jax.experimental.pallas import tpu as pltpu

LANE = 128          # vreg lane width: pad feature dims to multiples of this
_NEG_BIG = -1e30    # finite "-inf" for masking padded softmax columns


def _round_up(v, m):
    return (v + m - 1) // m * m


def _choose_bn(n, block_n):
    """Batch tile size: as large as block_n, but capped so the grid has at
    least 2 steps when the batch allows (v7x megacore), multiple of 8."""
    n8 = _round_up(max(n, 8), 8)
    half = _round_up((n8 + 1) // 2, 8)
    bn = min(_round_up(block_n, 8), max(half, 8))
    return max(bn, 8)


# ----------------------------------------------------------------------------
# Activations.
# Kernel-side version (may use pl.* primitives, handles lane padding);
# reference-side version (pure jnp, unpadded) for validation.
# ----------------------------------------------------------------------------
def _activation_kernel(h, name, real_dim):
    """Activation inside the Pallas kernel. h: (bn, d_pad) f32; real_dim is
    the unpadded feature width (softmax/logsoftmax ignore padded columns)."""
    if name in ("none", None):
        return h
    if name == "relu":
        return jnp.maximum(h, 0.0)
    if name == "tanh":
        return jnp.tanh(h)
    if name == "sigmoid":
        return jax.nn.sigmoid(h)
    if name == "lrelu":
        return jnp.where(h >= 0.0, h, 0.01 * h)  # nn.LeakyReLU default slope
    if name in ("softmax", "logsoftmax"):
        d_pad = h.shape[-1]
        if d_pad != real_dim:
            col = jax.lax.broadcasted_iota(jnp.int32, h.shape, 1)
            h = jnp.where(col < real_dim, h, _NEG_BIG)
        m = jnp.max(h, axis=-1, keepdims=True)
        e = jnp.exp(h - m)
        s = jnp.sum(e, axis=-1, keepdims=True)
        if name == "softmax":
            return e * pl.reciprocal(s, approx=True)   # EUP vrcp, ~free
        return (h - m) - jnp.log(s)
    raise ValueError(f"unknown activation {name!r}")


def _activation_ref(h, name):
    if name in ("none", None):
        return h
    if name == "relu":
        return jnp.maximum(h, 0.0)
    if name == "tanh":
        return jnp.tanh(h)
    if name == "sigmoid":
        return jax.nn.sigmoid(h)
    if name == "lrelu":
        return jnp.where(h >= 0.0, h, 0.01 * h)
    if name == "softmax":
        m = jnp.max(h, axis=1, keepdims=True)
        e = jnp.exp(h - m)
        return e / jnp.sum(e, axis=1, keepdims=True)
    if name == "logsoftmax":
        m = jnp.max(h, axis=1, keepdims=True)
        s = h - m
        return s - jnp.log(jnp.sum(jnp.exp(s), axis=1, keepdims=True))
    raise ValueError(f"unknown activation {name!r}")


# ----------------------------------------------------------------------------
# Fused MLP kernel: all Linear layers + activations for one batch tile.
# ----------------------------------------------------------------------------
def _mlp_kernel(*refs, nonlins, real_dims):
    x_ref = refs[0]                 # (bn, in_dim) bf16
    out_ref = refs[-1]              # (bn, out_dim_pad) f32
    param_refs = refs[1:-1]         # interleaved: w0, b0, w1, b1, ...

    h = x_ref[...]                  # bf16 operand for the first matmul
    for i, act in enumerate(nonlins):
        w = param_refs[2 * i][...]          # bf16, VMEM-resident
        b = param_refs[2 * i + 1][...]      # f32  (1, d_out_pad)
        h = jnp.dot(h.astype(w.dtype), w,
                    preferred_element_type=jnp.float32) + b
        h = _activation_kernel(h, act, real_dims[i])
    out_ref[...] = h.astype(out_ref.dtype)


# ----------------------------------------------------------------------------
# One-time parameter preparation (pad + cast), outside the hot path.
# ----------------------------------------------------------------------------
def prepare_params(params, in_dim, compute_dtype=jnp.bfloat16):
    """params: list of (w, b) with w: (d_in, d_out) f32, b: (1, d_out) f32.
    Returns (flat_padded_params, dims). First weight keeps its true row count
    (x is streamed unpadded on the feature dim); everything else is padded to
    lane-dense multiples of 128. Zero-padded weight rows neutralize whatever
    the previous layer left in its padded activation columns."""
    flat = []
    dims = []
    d_prev_pad = in_dim
    for w, b in params:
        d_out = int(w.shape[1])
        d_out_pad = _round_up(d_out, LANE)
        w_p = jnp.zeros((d_prev_pad, d_out_pad), compute_dtype)
        w_p = w_p.at[: w.shape[0], :d_out].set(jnp.asarray(w, compute_dtype))
        b2 = jnp.asarray(b, jnp.float32).reshape(1, -1)
        b_p = jnp.zeros((1, d_out_pad), jnp.float32).at[:, :d_out].set(b2)
        flat += [w_p, b_p]
        dims.append(d_out)
        d_prev_pad = d_out_pad
    return tuple(flat), tuple(dims)


# ----------------------------------------------------------------------------
# Forward wrapper: tiling + pallas_call, all under one jit so the residual
# reshape/cast/pad/slice fuse instead of making extra HBM passes.
# ----------------------------------------------------------------------------
@functools.partial(jax.jit,
                   static_argnames=("nonlins", "in_dim", "dims", "block_n"))
def mlp_forward(x, flat_params, *, nonlins, in_dim, dims, block_n=512):
    n = x.shape[0]
    x2 = jnp.asarray(x).reshape(n, in_dim).astype(jnp.bfloat16)  # torch.reshape

    out_dim = dims[-1]
    out_pad = _round_up(out_dim, LANE)

    bn = _choose_bn(n, block_n)
    n_pad = _round_up(n, bn)
    grid = (n_pad // bn,)
    if n_pad != n:
        x2 = jnp.pad(x2, ((0, n_pad - n), (0, 0)))   # fused under jit

    # x tile: feature dim spans the full (unpadded) array dim -> legal block.
    in_specs = [pl.BlockSpec((bn, in_dim), lambda i: (i, 0))]
    for w_p, b_p in zip(flat_params[0::2], flat_params[1::2]):
        in_specs.append(pl.BlockSpec(w_p.shape, lambda i: (0, 0)))  # resident
        in_specs.append(pl.BlockSpec(b_p.shape, lambda i: (0, 0)))  # resident
    out_specs = pl.BlockSpec((bn, out_pad), lambda i: (i, 0))

    # Advisory cost estimate for the XLA scheduler.
    k_seq = [in_dim] + [_round_up(d, LANE) for d in dims[:-1]]
    n_seq = [_round_up(d, LANE) for d in dims]
    flops = 2 * n_pad * sum(a * b for a, b in zip(k_seq, n_seq))
    transc = sum(n_pad * _round_up(d, LANE) for d, act in zip(dims, nonlins)
                 if act in ("tanh", "sigmoid", "softmax", "logsoftmax"))
    param_bytes = sum(int(a.size) * a.dtype.itemsize for a in flat_params)
    bytes_acc = int(x2.size) * 2 + param_bytes + n_pad * out_pad * 4

    # VMEM budget: double-buffered x/out tiles + (double-buffered) residents.
    compiler_kwargs = dict(dimension_semantics=("parallel",))
    vmem_est = 2 * bn * in_dim * 2 + 2 * bn * out_pad * 4 + 2 * param_bytes
    if vmem_est > (14 << 20):          # above the v5e 16 MiB scoped default
        compiler_kwargs["vmem_limit_bytes"] = int(min(vmem_est + (4 << 20),
                                                      48 << 20))

    kernel = functools.partial(_mlp_kernel, nonlins=tuple(nonlins),
                               real_dims=tuple(dims))
    out = pl.pallas_call(
        kernel,
        out_shape=jax.ShapeDtypeStruct((n_pad, out_pad), jnp.float32),
        grid=grid,
        in_specs=in_specs,
        out_specs=out_specs,
        compiler_params=pltpu.CompilerParams(**compiler_kwargs),
        cost_estimate=pl.CostEstimate(
            flops=flops, transcendentals=transc, bytes_accessed=bytes_acc),
    )(x2, *flat_params)
    return out[:n, :out_dim]


# ----------------------------------------------------------------------------
# Deterministic parameter init + pure-JAX reference for validation.
# ----------------------------------------------------------------------------
def init_params(key, in_dim, dims):
    params = []
    d_prev = in_dim
    for d in dims:
        key, kw, kb = jax.random.split(key, 3)
        bound = 1.0 / jnp.sqrt(d_prev)
        # stored pre-transposed: (d_in, d_out)
        w = jax.random.uniform(kw, (d_prev, d), jnp.float32, -bound, bound)
        b = jax.random.uniform(kb, (1, d), jnp.float32, -bound, bound)
        params.append((w, b))
        d_prev = d
    return params


def mlp_reference(x, params, nonlins, in_dim, compute_dtype=jnp.bfloat16):
    """Pure-JAX reference mirroring the kernel's bf16-operand matmuls.
    (Not bit-identical to an f32 torch MLP; tolerance below accounts for
    bf16 operands + the approximate softmax reciprocal.)"""
    h = jnp.asarray(x, jnp.float32).reshape(x.shape[0], in_dim)
    for (w, b), act in zip(params, nonlins):
        h = jnp.dot(h.astype(compute_dtype), w.astype(compute_dtype),
                    preferred_element_type=jnp.float32) + b.reshape(1, -1)
        h = _activation_ref(h, act)
    return h


if __name__ == "__main__":
    # MLP(in_dim=32, dims=[64, 48, 16], nonlins=['relu', 'tanh', 'softmax'])
    in_dim = 32
    dims = (64, 48, 16)
    nonlins = ("relu", "tanh", "softmax")
    batch = 512          # enough rows for a 2-step batch grid (v7x megacore)

    key = jax.random.PRNGKey(0)
    kx, kp = jax.random.split(key)
    x = jax.random.normal(kx, (batch, in_dim), jnp.float32)
    params = init_params(kp, in_dim, dims)

    # Pad / cast parameters ONCE, outside the per-call hot path.
    flat_params, dims_t = prepare_params(params, in_dim)

    out = mlp_forward(x, flat_params, nonlins=nonlins, in_dim=in_dim,
                      dims=dims_t, block_n=512)
    out = jax.block_until_ready(out)

    ref = mlp_reference(x, params, nonlins, in_dim)
    assert out.shape == (batch, dims[-1]), out.shape
    # bf16 MXU operands + approximate (EUP) softmax reciprocal -> loose tol.
    assert jnp.allclose(out, ref, atol=2e-2, rtol=2e-2), (
        float(jnp.max(jnp.abs(out - ref)))
    )
    print("KERNEL_OK")
</pallas_src>

<mosaic_0001>
module attributes {stable_mosaic.version = 11 : i64} {
  func.func @_mlp_kernel(%arg0: i32, %arg1: memref<256x32xbf16, #tpu.memory_space<vmem>>, %arg2: memref<32x128xbf16, #tpu.memory_space<vmem>>, %arg3: memref<1x128xf32, #tpu.memory_space<vmem>>, %arg4: memref<128x128xbf16, #tpu.memory_space<vmem>>, %arg5: memref<1x128xf32, #tpu.memory_space<vmem>>, %arg6: memref<128x128xbf16, #tpu.memory_space<vmem>>, %arg7: memref<1x128xf32, #tpu.memory_space<vmem>>, %arg8: memref<256x128xf32, #tpu.memory_space<vmem>>) attributes {dimension_semantics = [#tpu.dimension_semantics<parallel>], iteration_bounds = array<i64: 2>, scalar_prefetch = 0 : i64, scratch_operands = 0 : i64, tpu.core_type = #tpu.core_type<tc>, window_params = [{transform_indices = @transform_0, window_bounds = array<i64: 256, 32>}, {pipeline_mode = #tpu.pipeline_mode<synchronous>, transform_indices = @transform_1, window_bounds = array<i64: 32, 128>}, {pipeline_mode = #tpu.pipeline_mode<synchronous>, transform_indices = @transform_2, window_bounds = array<i64: 1, 128>}, {pipeline_mode = #tpu.pipeline_mode<synchronous>, transform_indices = @transform_3, window_bounds = array<i64: 128, 128>}, {pipeline_mode = #tpu.pipeline_mode<synchronous>, transform_indices = @transform_4, window_bounds = array<i64: 1, 128>}, {pipeline_mode = #tpu.pipeline_mode<synchronous>, transform_indices = @transform_5, window_bounds = array<i64: 128, 128>}, {pipeline_mode = #tpu.pipeline_mode<synchronous>, transform_indices = @transform_6, window_bounds = array<i64: 1, 128>}, {transform_indices = @transform_7, window_bounds = array<i64: 256, 128>}]} {
    %c0 = arith.constant 0 : index
    %c0_0 = arith.constant 0 : index
    %0 = vector.load %arg1[%c0, %c0_0] : memref<256x32xbf16, #tpu.memory_space<vmem>>, vector<256x32xbf16>
    %c0_1 = arith.constant 0 : index
    %c0_2 = arith.constant 0 : index
    %1 = vector.load %arg2[%c0_1, %c0_2] : memref<32x128xbf16, #tpu.memory_space<vmem>>, vector<32x128xbf16>
    %c0_3 = arith.constant 0 : index
    %c0_4 = arith.constant 0 : index
    %2 = vector.load %arg3[%c0_3, %c0_4] : memref<1x128xf32, #tpu.memory_space<vmem>>, vector<1x128xf32>
    %cst = arith.constant dense<0.000000e+00> : vector<256x128xf32>
    %3 = tpu.matmul %0, %1, %cst {dimension_numbers = #tpu.dot_dimension_numbers<[1], [0], [0], [1], [0, 0, 1, 1], [], []>} : vector<256x32xbf16>, vector<32x128xbf16>, vector<256x128xf32> -> vector<256x128xf32>
    %4 = vector.broadcast %2 : vector<1x128xf32> to vector<256x128xf32>
    %5 = arith.addf %3, %4 : vector<256x128xf32>
    %cst_5 = arith.constant 0.000000e+00 : f32
    %6 = vector.broadcast %cst_5 : f32 to vector<256x128xf32>
    %7 = arith.maximumf %5, %6 : vector<256x128xf32>
    %c0_6 = arith.constant 0 : index
    %c0_7 = arith.constant 0 : index
    %8 = vector.load %arg4[%c0_6, %c0_7] : memref<128x128xbf16, #tpu.memory_space<vmem>>, vector<128x128xbf16>
    %c0_8 = arith.constant 0 : index
    %c0_9 = arith.constant 0 : index
    %9 = vector.load %arg5[%c0_8, %c0_9] : memref<1x128xf32, #tpu.memory_space<vmem>>, vector<1x128xf32>
    %10 = arith.truncf %7 : vector<256x128xf32> to vector<256x128xbf16>
    %cst_10 = arith.constant dense<0.000000e+00> : vector<256x128xf32>
    %11 = tpu.matmul %10, %8, %cst_10 {dimension_numbers = #tpu.dot_dimension_numbers<[1], [0], [0], [1], [0, 0, 1, 1], [], []>} : vector<256x128xbf16>, vector<128x128xbf16>, vector<256x128xf32> -> vector<256x128xf32>
    %12 = vector.broadcast %9 : vector<1x128xf32> to vector<256x128xf32>
    %13 = arith.addf %11, %12 : vector<256x128xf32>
    %14 = math.tanh %13 : vector<256x128xf32>
    %c0_11 = arith.constant 0 : index
    %c0_12 = arith.constant 0 : index
    %15 = vector.load %arg6[%c0_11, %c0_12] : memref<128x128xbf16, #tpu.memory_space<vmem>>, vector<128x128xbf16>
    %c0_13 = arith.constant 0 : index
    %c0_14 = arith.constant 0 : index
    %16 = vector.load %arg7[%c0_13, %c0_14] : memref<1x128xf32, #tpu.memory_space<vmem>>, vector<1x128xf32>
    %17 = arith.truncf %14 : vector<256x128xf32> to vector<256x128xbf16>
    %cst_15 = arith.constant dense<0.000000e+00> : vector<256x128xf32>
    %18 = tpu.matmul %17, %15, %cst_15 {dimension_numbers = #tpu.dot_dimension_numbers<[1], [0], [0], [1], [0, 0, 1, 1], [], []>} : vector<256x128xbf16>, vector<128x128xbf16>, vector<256x128xf32> -> vector<256x128xf32>
    %19 = vector.broadcast %16 : vector<1x128xf32> to vector<256x128xf32>
    %20 = arith.addf %18, %19 : vector<256x128xf32>
    %21 = tpu.iota {dimensions = array<i32: 1>} : vector<256x128xi32>
    %c16_i32 = arith.constant 16 : i32
    %22 = vector.broadcast %c16_i32 : i32 to vector<256x128xi32>
    %23 = arith.cmpi slt, %21, %22 : vector<256x128xi32>
    %cst_16 = arith.constant -1.000000e+30 : f32
    %24 = vector.broadcast %cst_16 : f32 to vector<256x128xf32>
    %25 = arith.select %23, %20, %24 : vector<256x128xi1>, vector<256x128xf32>
    %cst_17 = arith.constant dense<0xFF800000> : vector<256xf32>
    %26 = vector.multi_reduction <maximumf>, %25, %cst_17 [1] : vector<256x128xf32> to vector<256xf32>
    %27 = vector.shape_cast %26 : vector<256xf32> to vector<256x1xf32>
    %28 = vector.broadcast %27 : vector<256x1xf32> to vector<256x128xf32>
    %29 = arith.subf %25, %28 : vector<256x128xf32>
    %30 = math.exp %29 : vector<256x128xf32>
    %cst_18 = arith.constant dense<0.000000e+00> : vector<256xf32>
    %31 = vector.multi_reduction <add>, %30, %cst_18 [1] : vector<256x128xf32> to vector<256xf32>
    %32 = vector.shape_cast %31 : vector<256xf32> to vector<256x1xf32>
    %33 = tpu.reciprocal %32 {approx = true} : vector<256x1xf32> -> vector<256x1xf32>
    %34 = vector.broadcast %33 : vector<256x1xf32> to vector<256x128xf32>
    %35 = arith.mulf %30, %34 : vector<256x128xf32>
    %c0_19 = arith.constant 0 : index
    %c0_20 = arith.constant 0 : index
    %36 = vector.load %arg8[%c0_19, %c0_20] : memref<256x128xf32, #tpu.memory_space<vmem>>, vector<256x128xf32>
    tpu.vector_store %arg8[%c0_19, %c0_20], %35 {strides = array<i32>} : memref<256x128xf32, #tpu.memory_space<vmem>>, vector<256x128xf32>,
    return
  }
  func.func @transform_0(%arg0: i32) -> (i32, i32) {
    %c0_i32 = arith.constant 0 : i32
    %c0_i32_0 = arith.constant 0 : i32
    return %arg0, %c0_i32 : i32, i32
  }
  func.func @transform_1(%arg0: i32) -> (i32, i32) {
    %c0_i32 = arith.constant 0 : i32
    %c0_i32_0 = arith.constant 0 : i32
    %c0_i32_1 = arith.constant 0 : i32
    return %c0_i32, %c0_i32_0 : i32, i32
  }
  func.func @transform_2(%arg0: i32) -> (i32, i32) {
    %c0_i32 = arith.constant 0 : i32
    %c0_i32_0 = arith.constant 0 : i32
    %c0_i32_1 = arith.constant 0 : i32
    return %c0_i32, %c0_i32_0 : i32, i32
  }
  func.func @transform_3(%arg0: i32) -> (i32, i32) {
    %c0_i32 = arith.constant 0 : i32
    %c0_i32_0 = arith.constant 0 : i32
    %c0_i32_1 = arith.constant 0 : i32
    return %c0_i32, %c0_i32_0 : i32, i32
  }
  func.func @transform_4(%arg0: i32) -> (i32, i32) {
    %c0_i32 = arith.constant 0 : i32
    %c0_i32_0 = arith.constant 0 : i32
    %c0_i32_1 = arith.constant 0 : i32
    return %c0_i32, %c0_i32_0 : i32, i32
  }
  func.func @transform_5(%arg0: i32) -> (i32, i32) {
    %c0_i32 = arith.constant 0 : i32
    %c0_i32_0 = arith.constant 0 : i32
    %c0_i32_1 = arith.constant 0 : i32
    return %c0_i32, %c0_i32_0 : i32, i32
  }
  func.func @transform_6(%arg0: i32) -> (i32, i32) {
    %c0_i32 = arith.constant 0 : i32
    %c0_i32_0 = arith.constant 0 : i32
    %c0_i32_1 = arith.constant 0 : i32
    return %c0_i32, %c0_i32_0 : i32, i32
  }
  func.func @transform_7(%arg0: i32) -> (i32, i32) {
    %c0_i32 = arith.constant 0 : i32
    %c0_i32_0 = arith.constant 0 : i32
    return %arg0, %c0_i32 : i32, i32
  }
}

</mosaic_0001>

<llo_original>
// kernel: mlp_forward.1
$region0: #{mlp_forward.1}
  #allocation0 [shape = 'u32[]', space=smem, size = 0x4, offset = 0x4, fixed_abs, tag = 'smem constant byte address 0x4 - core index']
  #allocation1 [shape = 'u32[144,128]{1,0:T(1,128)}', space=vmem, size = 0x12000, scoped, tag = 'internal scratch']
  %s0 = inlined_call_operand.vmem [shape: bf16[512,32], index: 0, kind: input, shape index: {}]
  %s1 = inlined_call_operand.vmem [shape: bf16[32,128], index: 1, kind: input, shape index: {}]
  %s2 = inlined_call_operand.vmem [shape: f32[1,128], index: 2, kind: input, shape index: {}]
  %s3 = inlined_call_operand.vmem [shape: bf16[128,128], index: 3, kind: input, shape index: {}]
  %s4 = inlined_call_operand.vmem [shape: f32[1,128], index: 4, kind: input, shape index: {}]
  %s5 = inlined_call_operand.vmem [shape: bf16[128,128], index: 5, kind: input, shape index: {}]
  %s6 = inlined_call_operand.vmem [shape: f32[1,128], index: 6, kind: input, shape index: {}]
  %s7 = inlined_call_operand.vmem [shape: f32[512,128], index: 7, kind: output, shape index: {}]
  %s8 = sld [smem:[#allocation0]]
  $region61: #{mlp_forward.1} parent=0
    _
  %s10 = ssub.s32 1, %s8
  %s11 = scalar_select 0, %s10, %s8
  loop: start=0, step=1, limit=4
  $region2: #{mlp_forward.1} parent=0 // loop_pre_header
    _
  $region3: #{mlp_forward.1} parent=0 // loop_header
    %s13 = sphi 0, %s17
    %p14 = scmp.ge.s32.totalorder %s13, 4
    %s23 = sphi 0, %s25
    %s26 = sphi 0, %s23
    %s27 = sphi 0, %s26
    %s43 = sphi 0, %s27
    %s47 = sphi 0, %s47
    %s49 = sphi 0, %s47
    %s50 = sphi 0, %s49
    %s64 = sphi 0, %s50
    %s68 = sphi 0, %s68
    %s70 = sphi 0, %s68
    %s71 = sphi 0, %s70
    %s85 = sphi 0, %s71
    %s89 = sphi 0, %s89
    %s91 = sphi 0, %s89
    %s92 = sphi 0, %s91
    %s106 = sphi 0, %s92
    %s110 = sphi 0, %s110
    %s112 = sphi 0, %s110
    %s113 = sphi 0, %s112
    %s127 = sphi 0, %s113
    %s131 = sphi 0, %s131
    %s133 = sphi 0, %s131
    %s134 = sphi 0, %s133
    %s148 = sphi 0, %s134
    %s152 = sphi 0, %s152
    %s154 = sphi 0, %s152
    %s155 = sphi 0, %s154
    %s169 = sphi 0, %s155
    %s175 = sphi 0, %s177
    %s178 = sphi 0, %s175
    %s179 = sphi 0, %s178
    %s195 = sphi 0, %s179
  $region4: #{mlp_forward.1} parent=0 // loop_header_branch
    %16 = sbr.rel (%p14) target = $region8
  $region5: #{mlp_forward.1} parent=0 // loop_body
    %s18 = ssub.s32 %s13, 1
    %s19 = ssub.s32 %s13, 2
    %s20 = sadd.s32 %s13, 1
    %s21 = ssub.s32 %s13, %s20
    %p22 = scmp.eq.s32.totalorder %s21, 0
    %s24 = sadd.s32 %s23, 1
    %s25 = scalar_select %p22, %s23, %s24
    %p28 = pneg %p22
    %p29 = scmp.eq.s32.totalorder %s13, 1
    %p30 = por %p28, %p29
    %p31 = scmp.ne.s32.totalorder %s23, %s26
    %p32 = scmp.eq.s32.totalorder %s13, 0
    %p33 = por %p31, %p32
    %p34 = scmp.ne.s32.totalorder %s23, %s26
    %p35 = scmp.eq.s32.totalorder %s18, 1
    %p36 = por %p34, %p35
    %p37 = scmp.ne.s32.totalorder %s26, %s27
    %p38 = scmp.eq.s32.totalorder %s18, 0
    %p39 = por %p37, %p38
    %p40 = scmp.ne.s32.totalorder %s26, %s27
    %p41 = scmp.eq.s32.totalorder %s19, 1
    %p42 = por %p40, %p41
    %p44 = scmp.ne.s32.totalorder %s27, %s43
    %p45 = scmp.eq.s32.totalorder %s19, 0
    %p46 = por %p44, %p45
    %s48 = sadd.s32 %s47, 1
    %p51 = scmp.eq.s32.totalorder %s13, 1
    %p52 = scmp.ne.s32.totalorder %s47, %s49
    %p53 = scmp.eq.s32.totalorder %s13, 0
    %p54 = por %p52, %p53
    %p55 = scmp.ne.s32.totalorder %s47, %s49
    %p56 = scmp.eq.s32.totalorder %s18, 1
    %p57 = por %p55, %p56
    %p58 = scmp.ne.s32.totalorder %s49, %s50
    %p59 = scmp.eq.s32.totalorder %s18, 0
    %p60 = por %p58, %p59
    %p61 = scmp.ne.s32.totalorder %s49, %s50
    %p62 = scmp.eq.s32.totalorder %s19, 1
    %p63 = por %p61, %p62
    %p65 = scmp.ne.s32.totalorder %s50, %s64
    %p66 = scmp.eq.s32.totalorder %s19, 0
    %p67 = por %p65, %p66
    %s69 = sadd.s32 %s68, 1
    %p72 = scmp.eq.s32.totalorder %s13, 1
    %p73 = scmp.ne.s32.totalorder %s68, %s70
    %p74 = scmp.eq.s32.totalorder %s13, 0
    %p75 = por %p73, %p74
    %p76 = scmp.ne.s32.totalorder %s68, %s70
    %p77 = scmp.eq.s32.totalorder %s18, 1
    %p78 = por %p76, %p77
    %p79 = scmp.ne.s32.totalorder %s70, %s71
    %p80 = scmp.eq.s32.totalorder %s18, 0
    %p81 = por %p79, %p80
    %p82 = scmp.ne.s32.totalorder %s70, %s71
    %p83 = scmp.eq.s32.totalorder %s19, 1
    %p84 = por %p82, %p83
    %p86 = scmp.ne.s32.totalorder %s71, %s85
    %p87 = scmp.eq.s32.totalorder %s19, 0
    %p88 = por %p86, %p87
    %s90 = sadd.s32 %s89, 1
    %p93 = scmp.eq.s32.totalorder %s13, 1
    %p94 = scmp.ne.s32.totalorder %s89, %s91
    %p95 = scmp.eq.s32.totalorder %s13, 0
    %p96 = por %p94, %p95
    %p97 = scmp.ne.s32.totalorder %s89, %s91
    %p98 = scmp.eq.s32.totalorder %s18, 1
    %p99 = por %p97, %p98
    %p100 = scmp.ne.s32.totalorder %s91, %s92
    %p101 = scmp.eq.s32.totalorder %s18, 0
    %p102 = por %p100, %p101
    %p103 = scmp.ne.s32.totalorder %s91, %s92
    %p104 = scmp.eq.s32.totalorder %s19, 1
    %p105 = por %p103, %p104
    %p107 = scmp.ne.s32.totalorder %s92, %s106
    %p108 = scmp.eq.s32.totalorder %s19, 0
    %p109 = por %p107, %p108
    %s111 = sadd.s32 %s110, 1
    %p114 = scmp.eq.s32.totalorder %s13, 1
    %p115 = scmp.ne.s32.totalorder %s110, %s112
    %p116 = scmp.eq.s32.totalorder %s13, 0
    %p117 = por %p115, %p116
    %p118 = scmp.ne.s32.totalorder %s110, %s112
    %p119 = scmp.eq.s32.totalorder %s18, 1
    %p120 = por %p118, %p119
    %p121 = scmp.ne.s32.totalorder %s112, %s113
    %p122 = scmp.eq.s32.totalorder %s18, 0
    %p123 = por %p121, %p122
    %p124 = scmp.ne.s32.totalorder %s112, %s113
    %p125 = scmp.eq.s32.totalorder %s19, 1
    %p126 = por %p124, %p125
    %p128 = scmp.ne.s32.totalorder %s113, %s127
    %p129 = scmp.eq.s32.totalorder %s19, 0
    %p130 = por %p128, %p129
    %s132 = sadd.s32 %s131, 1
    %p135 = scmp.eq.s32.totalorder %s13, 1
    %p136 = scmp.ne.s32.totalorder %s131, %s133
    %p137 = scmp.eq.s32.totalorder %s13, 0
    %p138 = por %p136, %p137
    %p139 = scmp.ne.s32.totalorder %s131, %s133
    %p140 = scmp.eq.s32.totalorder %s18, 1
    %p141 = por %p139, %p140
    %p142 = scmp.ne.s32.totalorder %s133, %s134
    %p143 = scmp.eq.s32.totalorder %s18, 0
    %p144 = por %p142, %p143
    %p145 = scmp.ne.s32.totalorder %s133, %s134
    %p146 = scmp.eq.s32.totalorder %s19, 1
    %p147 = por %p145, %p146
    %p149 = scmp.ne.s32.totalorder %s134, %s148
    %p150 = scmp.eq.s32.totalorder %s19, 0
    %p151 = por %p149, %p150
    %s153 = sadd.s32 %s152, 1
    %p156 = scmp.eq.s32.totalorder %s13, 1
    %p157 = scmp.ne.s32.totalorder %s152, %s154
    %p158 = scmp.eq.s32.totalorder %s13, 0
    %p159 = por %p157, %p158
    %p160 = scmp.ne.s32.totalorder %s152, %s154
    %p161 = scmp.eq.s32.totalorder %s18, 1
    %p162 = por %p160, %p161
    %p163 = scmp.ne.s32.totalorder %s154, %s155
    %p164 = scmp.eq.s32.totalorder %s18, 0
    %p165 = por %p163, %p164
    %p166 = scmp.ne.s32.totalorder %s154, %s155
    %p167 = scmp.eq.s32.totalorder %s19, 1
    %p168 = por %p166, %p167
    %p170 = scmp.ne.s32.totalorder %s155, %s169
    %p171 = scmp.eq.s32.totalorder %s19, 0
    %p172 = por %p170, %p171
    %s173 = ssub.s32 %s13, %s20
    %p174 = scmp.eq.s32.totalorder %s173, 0
    %s176 = sadd.s32 %s175, 1
    %s177 = scalar_select %p174, %s175, %s176
    %p180 = pneg %p174
    %p181 = scmp.eq.s32.totalorder %s13, 1
    %p182 = por %p180, %p181
    %p183 = scmp.ne.s32.totalorder %s175, %s178
    %p184 = scmp.eq.s32.totalorder %s13, 0
    %p185 = por %p183, %p184
    %p186 = scmp.ne.s32.totalorder %s175, %s178
    %p187 = scmp.eq.s32.totalorder %s18, 1
    %p188 = por %p186, %p187
    %p189 = scmp.ne.s32.totalorder %s178, %s179
    %p190 = scmp.eq.s32.totalorder %s18, 0
    %p191 = por %p189, %p190
    %p192 = scmp.ne.s32.totalorder %s178, %s179
    %p193 = scmp.eq.s32.totalorder %s19, 1
    %p194 = por %p192, %p193
    %p196 = scmp.ne.s32.totalorder %s179, %s195
    %p197 = scmp.eq.s32.totalorder %s19, 0
    %p198 = por %p196, %p197
    %p199 = scmp.le.s32.totalorder 1, %s13
    %p200 = scmp.lt.s32.totalorder %s13, 3
    %p201 = pnand %p199, %p200
    %p202 = pneg %p201
    // Predicated region
    $region9: #{mlp_forward.1} parent=5 // pred_check
      _
    $region10: #{mlp_forward.1} parent=5 // pred_check_branch
      %204 = sbr.rel (%p201) target = $region12
    $region11: #{mlp_forward.1} parent=5 // pred_region
      %s205 = ssub.s32 %s13, 1
      // Predicated region
      $region13: #{mlp_forward.1} parent=11 // pred_check
        %p206 = pneg %p60
      $region14: #{mlp_forward.1} parent=11 // pred_check_branch
        %208 = sbr.rel (%p206) target = $region16
      $region15: #{mlp_forward.1} parent=11 // pred_region
        _
      $region16: #{mlp_forward.1} parent=11 // pred_fallthru
        _
      // Predicated region
      $region17: #{mlp_forward.1} parent=11 // pred_check
        %p209 = pneg %p81
      $region18: #{mlp_forward.1} parent=11 // pred_check_branch
        %211 = sbr.rel (%p209) target = $region20
      $region19: #{mlp_forward.1} parent=11 // pred_region
        _
      $region20: #{mlp_forward.1} parent=11 // pred_fallthru
        _
      // Predicated region
      $region21: #{mlp_forward.1} parent=11 // pred_check
        %p212 = pneg %p102
      $region22: #{mlp_forward.1} parent=11 // pred_check_branch
        %214 = sbr.rel (%p212) target = $region24
      $region23: #{mlp_forward.1} parent=11 // pred_region
        _
      $region24: #{mlp_forward.1} parent=11 // pred_fallthru
        _
      // Predicated region
      $region25: #{mlp_forward.1} parent=11 // pred_check
        %p215 = pneg %p123
      $region26: #{mlp_forward.1} parent=11 // pred_check_branch
        %217 = sbr.rel (%p215) target = $region28
      $region27: #{mlp_forward.1} parent=11 // pred_region
        _
      $region28: #{mlp_forward.1} parent=11 // pred_fallthru
        _
      // Predicated region
      $region29: #{mlp_forward.1} parent=11 // pred_check
        %p218 = pneg %p144
      $region30: #{mlp_forward.1} parent=11 // pred_check_branch
        %220 = sbr.rel (%p218) target = $region32
      $region31: #{mlp_forward.1} parent=11 // pred_region
        _
      $region32: #{mlp_forward.1} parent=11 // pred_fallthru
        _
      // Predicated region
      $region33: #{mlp_forward.1} parent=11 // pred_check
        %p221 = pneg %p165
      $region34: #{mlp_forward.1} parent=11 // pred_check_branch
        %223 = sbr.rel (%p221) target = $region36
      $region35: #{mlp_forward.1} parent=11 // pred_region
        _
      $region36: #{mlp_forward.1} parent=11 // pred_fallthru
        _
    $region12: #{mlp_forward.1} parent=5 // pred_fallthru
      _
    %p224 = scmp.lt.s32.totalorder %s13, 2
    // Predicated region
    $region37: #{mlp_forward.1} parent=5 // pred_check
      %p225 = pneg %p224
    $region38: #{mlp_forward.1} parent=5 // pred_check_branch
      %227 = sbr.rel (%p225) target = $region40
    $region39: #{mlp_forward.1} parent=5 // pred_region
      // Predicated region
      $region41: #{mlp_forward.1} parent=39 // pred_check
        %p228 = pneg %p33
      $region42: #{mlp_forward.1} parent=39 // pred_check_branch
        %230 = sbr.rel (%p228) target = $region44
      $region43: #{mlp_forward.1} parent=39 // pred_region
        %s231 = smul.u32 32, %s13
        %p232 = scmp.lt.s32.totalorder %s231, 63
        %s233 = scalar_select %p232, %s231, 63
        %s234 = smul.addr %s233, 4
        %s235 = scalar_lea.vmem %s0, %s234
        %s236 = smul.u32 32, %s13
      $region44: #{mlp_forward.1} parent=39 // pred_fallthru
        _
    $region40: #{mlp_forward.1} parent=5 // pred_fallthru
      _
    %p237 = scmp.le.s32.totalorder 1, %s13
    %p238 = scmp.lt.s32.totalorder %s13, 3
    %p239 = pnand %p237, %p238
    %p240 = pneg %p239
    // Predicated region
    $region45: #{mlp_forward.1} parent=5 // pred_check
      _
    $region46: #{mlp_forward.1} parent=5 // pred_check_branch
      %242 = sbr.rel (%p239) target = $region48
    $region47: #{mlp_forward.1} parent=5 // pred_region
      %s243 = ssub.s32 %s13, 1
      %s244 = smul.u32 32, %s18
      %p245 = scmp.lt.s32.totalorder %s244, 63
      %s246 = scalar_select %p245, %s244, 63
      %s247 = smul.addr %s246, 4
      %s248 = scalar_lea.vmem %s0, %s247
      %p249 = pneg %p39
      %p250 = pneg %p36
      %p251 = pneg %p60
      %p252 = pneg %p57
      %p253 = pneg %p81
      %p254 = pneg %p78
      %p255 = pneg %p102
      %p256 = pneg %p99
      %p257 = pneg %p123
      %p258 = pneg %p120
      %p259 = pneg %p144
      %p260 = pneg %p141
      %p261 = pneg %p165
      %p262 = pneg %p162
      %p263 = pneg %p191
      %p264 = pneg %p188
      %s265 = smul.u32 32, %s18
      %p266 = scmp.lt.s32.totalorder %s265, 63
      %s267 = scalar_select %p266, %s265, 63
      %s268 = smul.addr %s267, 8
      %s269 = scalar_lea.vmem %s7, %s268
      %s270 = smul.u32 32, %s18
      %p271 = scmp.lt.s32.totalorder %s270, 63
      %s272 = scalar_select %p271, %s270, 63
      %s273 = smul.addr %s272, 4
      %s274 = scalar_lea.vmem %s0, %s273
      %s275 = smul.u32 32, %s18
      %s276 = smul.u32 32, %s18
      %p277 = scmp.lt.s32.totalorder %s276, 63
      %s278 = scalar_select %p277, %s276, 63
      %s279 = smul.addr %s278, 8
      %s280 = scalar_lea.vmem %s7, %s279
      %s281 = smul.u32 32, %s18
      %v283 = vld [vmem:[%s274] sm:$0xf]
      %v284 = vld [vmem:[%s274 + $0x4] sm:$0xf]
      %v285 = vld [vmem:[%s274 + $0x8] sm:$0xf]
      %v286 = vld [vmem:[%s274 + $0xc] sm:$0xf]
      %v287 = vld [vmem:[%s274 + $0x10] sm:$0xf]
      %v288 = vld [vmem:[%s274 + $0x14] sm:$0xf]
      %v289 = vld [vmem:[%s274 + $0x18] sm:$0xf]
      %v290 = vld [vmem:[%s274 + $0x1c] sm:$0xf]
      %v291 = vld [vmem:[%s274 + $0x20] sm:$0xf]
      %v292 = vld [vmem:[%s274 + $0x24] sm:$0xf]
      %v293 = vld [vmem:[%s274 + $0x28] sm:$0xf]
      %v294 = vld [vmem:[%s274 + $0x2c] sm:$0xf]
      %v295 = vld [vmem:[%s274 + $0x30] sm:$0xf]
      %v296 = vld [vmem:[%s274 + $0x34] sm:$0xf]
      %v297 = vld [vmem:[%s274 + $0x38] sm:$0xf]
      %v298 = vld [vmem:[%s274 + $0x3c] sm:$0xf]
      %v299 = vld [vmem:[%s274 + $0x40] sm:$0xf]
      %v300 = vld [vmem:[%s274 + $0x44] sm:$0xf]
      %v301 = vld [vmem:[%s274 + $0x48] sm:$0xf]
      %v302 = vld [vmem:[%s274 + $0x4c] sm:$0xf]
      %v303 = vld [vmem:[%s274 + $0x50] sm:$0xf]
      %v304 = vld [vmem:[%s274 + $0x54] sm:$0xf]
      %v305 = vld [vmem:[%s274 + $0x58] sm:$0xf]
      %v306 = vld [vmem:[%s274 + $0x5c] sm:$0xf]
      %v307 = vld [vmem:[%s274 + $0x60] sm:$0xf]
      %v308 = vld [vmem:[%s274 + $0x64] sm:$0xf]
      %v309 = vld [vmem:[%s274 + $0x68] sm:$0xf]
      %v310 = vld [vmem:[%s274 + $0x6c] sm:$0xf]
      %v311 = vld [vmem:[%s274 + $0x70] sm:$0xf]
      %v312 = vld [vmem:[%s274 + $0x74] sm:$0xf]
      %v313 = vld [vmem:[%s274 + $0x78] sm:$0xf]
      %v314 = vld [vmem:[%s274 + $0x7c] sm:$0xf]
      %v315 = vld [vmem:[%s1] sm:$0xf]
      %v316 = vld [vmem:[%s1 + $0x4] sm:$0xf]
      %v317 = vld [vmem:[%s1 + $0x8] sm:$0xf]
      %v318 = vld [vmem:[%s1 + $0xc] sm:$0xf]
      %v319 = vld [vmem:[%s2] sm:$0x1]
      %v321 = vlaneseq
      %v322 = vshrl.u32 %v321, 7
      %v323 = vsub.s32 0, %v322
      %v324 = vrot.slane %v319, %v323
      %v358 = vunpack.c.l.b16 %v283
      %v359 = vunpack.c.l.b16 %v284
      %v360 = vunpack.c.l.b16 %v285
      %v361 = vunpack.c.l.b16 %v286
      %v362 = vunpack.c.l.b16 %v287
      %v363 = vunpack.c.l.b16 %v288
      %v364 = vunpack.c.l.b16 %v289
      %v365 = vunpack.c.l.b16 %v290
      %v366 = vunpack.c.l.b16 %v291
      %v367 = vunpack.c.l.b16 %v292
      %v368 = vunpack.c.l.b16 %v293
      %v369 = vunpack.c.l.b16 %v294
      %v370 = vunpack.c.l.b16 %v295
      %v371 = vunpack.c.l.b16 %v296
      %v372 = vunpack.c.l.b16 %v297
      %v373 = vunpack.c.l.b16 %v298
      %v374 = vunpack.c.l.b16 %v299
      %v375 = vunpack.c.l.b16 %v300
      %v376 = vunpack.c.l.b16 %v301
      %v377 = vunpack.c.l.b16 %v302
      %v378 = vunpack.c.l.b16 %v303
      %v379 = vunpack.c.l.b16 %v304
      %v380 = vunpack.c.l.b16 %v305
      %v381 = vunpack.c.l.b16 %v306
      %v382 = vunpack.c.l.b16 %v307
      %v383 = vunpack.c.l.b16 %v308
      %v384 = vunpack.c.l.b16 %v309
      %v385 = vunpack.c.l.b16 %v310
      %v386 = vunpack.c.l.b16 %v311
      %v387 = vunpack.c.l.b16 %v312
      %v388 = vunpack.c.l.b16 %v313
      %v389 = vunpack.c.l.b16 %v314
      %v390 = vpack.c.b16 %v359, %v358
      %v391 = vpack.c.b16 %v361, %v360
      %v392 = vpack.c.b16 %v363, %v362
      %v393 = vpack.c.b16 %v365, %v364
      %v394 = vpack.c.b16 %v367, %v366
      %v395 = vpack.c.b16 %v369, %v368
      %v396 = vpack.c.b16 %v371, %v370
      %v397 = vpack.c.b16 %v373, %v372
      %v398 = vpack.c.b16 %v375, %v374
      %v399 = vpack.c.b16 %v377, %v376
      %v400 = vpack.c.b16 %v379, %v378
      %v401 = vpack.c.b16 %v381, %v380
      %v402 = vpack.c.b16 %v383, %v382
      %v403 = vpack.c.b16 %v385, %v384
      %v404 = vpack.c.b16 %v387, %v386
      %v405 = vpack.c.b16 %v389, %v388
      %v410 = vunpack.c.l.b16 %v315
      %v411 = vunpack.c.l.b16 %v316
      %v412 = vunpack.c.l.b16 %v317
      %v413 = vunpack.c.l.b16 %v318
      %v414 = vpack.c.b16 %v411, %v410
      %v415 = vpack.c.b16 %v413, %v412
      %vm418 = vcmask 261120
      %v420 = vsel %vm418, %v390, 0
      %v423 = vsel %vm418, %v391, 0
      %v426 = vsel %vm418, %v392, 0
      %v429 = vsel %vm418, %v393, 0
      %v432 = vsel %vm418, %v394, 0
      %v435 = vsel %vm418, %v395, 0
      %v438 = vsel %vm418, %v396, 0
      %v441 = vsel %vm418, %v397, 0
      %v444 = vsel %vm418, %v398, 0
      %v447 = vsel %vm418, %v399, 0
      %v450 = vsel %vm418, %v400, 0
      %v453 = vsel %vm418, %v401, 0
      %v456 = vsel %vm418, %v402, 0
      %v459 = vsel %vm418, %v403, 0
      %v462 = vsel %vm418, %v404, 0
      %v465 = vsel %vm418, %v405, 0
      %467 = vmatprep.subr.bf16.mxu0 0
      %468 = vmatpush1.bf16.msra.mxu0 %v414
      %469 = vmatprep.subr.bf16.mxu0 0
      %470 = vmatpush1.bf16.msra.mxu0 %v415
      %471 = vmatprep.subr.bf16.mxu0 0
      %472 = vmatpush1.bf16.msra.mxu0 0
      %473 = vmatprep.subr.bf16.mxu0 0
      %474 = vmatpush1.bf16.msra.mxu0 0
      %475 = vmatprep.subr.bf16.mxu0 0
      %476 = vmatpush1.bf16.msra.mxu0 0
      %477 = vmatprep.subr.bf16.mxu0 0
      %478 = vmatpush1.bf16.msra.mxu0 0
      %479 = vmatprep.subr.bf16.mxu0 0
      %480 = vmatpush1.bf16.msra.mxu0 0
      %481 = vmatprep.subr.bf16.mxu0 0
      %482 = vmatpush1.bf16.msra.mxu0 0
      %483 = vmatprep.subr.bf16.mxu0 0
      %484 = vmatpush1.bf16.msra.mxu0 0
      %485 = vmatprep.subr.bf16.mxu0 0
      %486 = vmatpush1.bf16.msra.mxu0 0
      %487 = vmatprep.subr.bf16.mxu0 0
      %488 = vmatpush1.bf16.msra.mxu0 0
      %489 = vmatprep.subr.bf16.mxu0 0
      %490 = vmatpush1.bf16.msra.mxu0 0
      %491 = vmatprep.subr.bf16.mxu0 0
      %492 = vmatpush1.bf16.msra.mxu0 0
      %493 = vmatprep.subr.bf16.mxu0 0
      %494 = vmatpush1.bf16.msra.mxu0 0
      %495 = vmatprep.subr.bf16.mxu0 0
      %496 = vmatpush1.bf16.msra.mxu0 0
      %497 = vmatprep.subr.bf16.mxu0 0
      %498 = vmatpush1.bf16.msra.mxu0 0
      %499 = vmatprep.mubr.bf16.mxu0 0
      %500 = vmatmul.mubr.bf16.gmra.mrb[0].mxu0 %v420
      %v501 = vpop.f32.mrb[0].mxu0
      %v502 = vadd.f32 %v324, %v501
      %v503 = vpop.f32.mrb[0].mxu0
      %v504 = vpop.f32.mrb[0].mxu0
      %v505 = vadd.f32 %v324, %v504
      %v506 = vpop.f32.mrb[0].mxu0
      %507 = vmatprep.mubr.bf16.mxu0 0
      %508 = vmatmul.mubr.bf16.gmra.mrb[0].mxu0 %v423
      %v509 = vpop.f32.mrb[0].mxu0
      %v510 = vadd.f32 %v324, %v509
      %v511 = vpop.f32.mrb[0].mxu0
      %v512 = vpop.f32.mrb[0].mxu0
      %v513 = vadd.f32 %v324, %v512
      %v514 = vpop.f32.mrb[0].mxu0
      %515 = vmatprep.mubr.bf16.mxu0 0
      %516 = vmatmul.mubr.bf16.gmra.mrb[0].mxu0 %v426
      %v517 = vpop.f32.mrb[0].mxu0
      %v518 = vadd.f32 %v324, %v517
      %v519 = vpop.f32.mrb[0].mxu0
      %v520 = vpop.f32.mrb[0].mxu0
      %v521 = vadd.f32 %v324, %v520
      %v522 = vpop.f32.mrb[0].mxu0
      %523 = vmatprep.mubr.bf16.mxu0 0
      %524 = vmatmul.mubr.bf16.gmra.mrb[0].mxu0 %v429
      %v525 = vpop.f32.mrb[0].mxu0
      %v526 = vadd.f32 %v324, %v525
      %v527 = vpop.f32.mrb[0].mxu0
      %v528 = vpop.f32.mrb[0].mxu0
      %v529 = vadd.f32 %v324, %v528
      %v530 = vpop.f32.mrb[0].mxu0
      %531 = vmatprep.mubr.bf16.mxu0 0
      %532 = vmatmul.mubr.bf16.gmra.mrb[0].mxu0 %v432
      %v533 = vpop.f32.mrb[0].mxu0
      %v534 = vadd.f32 %v324, %v533
      %v535 = vpop.f32.mrb[0].mxu0
      %v536 = vpop.f32.mrb[0].mxu0
      %v537 = vadd.f32 %v324, %v536
      %v538 = vpop.f32.mrb[0].mxu0
      %539 = vmatprep.mubr.bf16.mxu0 0
      %540 = vmatmul.mubr.bf16.gmra.mrb[0].mxu0 %v435
      %v541 = vpop.f32.mrb[0].mxu0
      %v542 = vadd.f32 %v324, %v541
      %v543 = vpop.f32.mrb[0].mxu0
      %v544 = vpop.f32.mrb[0].mxu0
      %v545 = vadd.f32 %v324, %v544
      %v546 = vpop.f32.mrb[0].mxu0
      %547 = vmatprep.mubr.bf16.mxu0 0
      %548 = vmatmul.mubr.bf16.gmra.mrb[0].mxu0 %v438
      %v549 = vpop.f32.mrb[0].mxu0
      %v550 = vadd.f32 %v324, %v549
      %v551 = vpop.f32.mrb[0].mxu0
      %v552 = vpop.f32.mrb[0].mxu0
      %v553 = vadd.f32 %v324, %v552
      %v554 = vpop.f32.mrb[0].mxu0
      %555 = vmatprep.mubr.bf16.mxu0 0
      %556 = vmatmul.mubr.bf16.gmra.mrb[0].mxu0 %v441
      %v557 = vpop.f32.mrb[0].mxu0
      %v558 = vadd.f32 %v324, %v557
      %v559 = vpop.f32.mrb[0].mxu0
      %v560 = vpop.f32.mrb[0].mxu0
      %v561 = vadd.f32 %v324, %v560
      %v562 = vpop.f32.mrb[0].mxu0
      %563 = vmatprep.mubr.bf16.mxu0 0
      %564 = vmatmul.mubr.bf16.gmra.mrb[0].mxu0 %v444
      %v565 = vpop.f32.mrb[0].mxu0
      %v566 = vadd.f32 %v324, %v565
      %v567 = vpop.f32.mrb[0].mxu0
      %v568 = vpop.f32.mrb[0].mxu0
      %v569 = vadd.f32 %v324, %v568
      %v570 = vpop.f32.mrb[0].mxu0
      %571 = vmatprep.mubr.bf16.mxu0 0
      %572 = vmatmul.mubr.bf16.gmra.mrb[0].mxu0 %v447
      %v573 = vpop.f32.mrb[0].mxu0
      %v574 = vadd.f32 %v324, %v573
      %v575 = vpop.f32.mrb[0].mxu0
      %v576 = vpop.f32.mrb[0].mxu0
      %v577 = vadd.f32 %v324, %v576
      %v578 = vpop.f32.mrb[0].mxu0
      %579 = vmatprep.mubr.bf16.mxu0 0
      %580 = vmatmul.mubr.bf16.gmra.mrb[0].mxu0 %v450
      %v581 = vpop.f32.mrb[0].mxu0
      %v582 = vadd.f32 %v324, %v581
      %v583 = vpop.f32.mrb[0].mxu0
      %v584 = vpop.f32.mrb[0].mxu0
      %v585 = vadd.f32 %v324, %v584
      %v586 = vpop.f32.mrb[0].mxu0
      %587 = vmatprep.mubr.bf16.mxu0 0
      %588 = vmatmul.mubr.bf16.gmra.mrb[0].mxu0 %v453
      %v589 = vpop.f32.mrb[0].mxu0
      %v590 = vadd.f32 %v324, %v589
      %v591 = vpop.f32.mrb[0].mxu0
      %v592 = vpop.f32.mrb[0].mxu0
      %v593 = vadd.f32 %v324, %v592
      %v594 = vpop.f32.mrb[0].mxu0
      %595 = vmatprep.mubr.bf16.mxu0 0
      %596 = vmatmul.mubr.bf16.gmra.mrb[0].mxu0 %v456
      %v597 = vpop.f32.mrb[0].mxu0
      %v598 = vadd.f32 %v324, %v597
      %v599 = vpop.f32.mrb[0].mxu0
      %v600 = vpop.f32.mrb[0].mxu0
      %v601 = vadd.f32 %v324, %v600
      %v602 = vpop.f32.mrb[0].mxu0
      %603 = vmatprep.mubr.bf16.mxu0 0
      %604 = vmatmul.mubr.bf16.gmra.mrb[0].mxu0 %v459
      %v605 = vpop.f32.mrb[0].mxu0
      %v606 = vadd.f32 %v324, %v605
      %v607 = vpop.f32.mrb[0].mxu0
      %v608 = vpop.f32.mrb[0].mxu0
      %v609 = vadd.f32 %v324, %v608
      %v610 = vpop.f32.mrb[0].mxu0
      %611 = vmatprep.mubr.bf16.mxu0 0
      %612 = vmatmul.mubr.bf16.gmra.mrb[0].mxu0 %v462
      %v613 = vpop.f32.mrb[0].mxu0
      %v614 = vadd.f32 %v324, %v613
      %v615 = vpop.f32.mrb[0].mxu0
      %v616 = vpop.f32.mrb[0].mxu0
      %v617 = vadd.f32 %v324, %v616
      %v618 = vpop.f32.mrb[0].mxu0
      %619 = vmatprep.mubr.bf16.mxu0 0
      %620 = vmatmul.mubr.bf16.gmra.mrb[0].mxu0 %v465
      %v621 = vpop.f32.mrb[0].mxu0
      %v622 = vadd.f32 %v324, %v621
      %v623 = vpop.f32.mrb[0].mxu0
      %v624 = vpop.f32.mrb[0].mxu0
      %v625 = vadd.f32 %v324, %v624
      %v626 = vpop.f32.mrb[0].mxu0
      %627 = vdwg.mxu0
      %v628 = vmax.f32 %v502, 0.0
      %v629 = vmax.f32 %v505, 0.0
      %v630 = vmax.f32 %v510, 0.0
      %v631 = vmax.f32 %v513, 0.0
      %v632 = vmax.f32 %v518, 0.0
      %v633 = vmax.f32 %v521, 0.0
      %v634 = vmax.f32 %v526, 0.0
      %v635 = vmax.f32 %v529, 0.0
      %v636 = vmax.f32 %v534, 0.0
      %v637 = vmax.f32 %v537, 0.0
      %v638 = vmax.f32 %v542, 0.0
      %v639 = vmax.f32 %v545, 0.0
      %v640 = vmax.f32 %v550, 0.0
      %v641 = vmax.f32 %v553, 0.0
      %v642 = vmax.f32 %v558, 0.0
      %v643 = vmax.f32 %v561, 0.0
      %v644 = vmax.f32 %v566, 0.0
      %v645 = vmax.f32 %v569, 0.0
      %v646 = vmax.f32 %v574, 0.0
      %v647 = vmax.f32 %v577, 0.0
      %v648 = vmax.f32 %v582, 0.0
      %v649 = vmax.f32 %v585, 0.0
      %v650 = vmax.f32 %v590, 0.0
      %v651 = vmax.f32 %v593, 0.0
      %v652 = vmax.f32 %v598, 0.0
      %v653 = vmax.f32 %v601, 0.0
      %v654 = vmax.f32 %v606, 0.0
      %v655 = vmax.f32 %v609, 0.0
      %v656 = vmax.f32 %v614, 0.0
      %v657 = vmax.f32 %v617, 0.0
      %v658 = vmax.f32 %v622, 0.0
      %v659 = vmax.f32 %v625, 0.0
      %v660 = vld [vmem:[%s3] sm:$0xf]
      %v661 = vld [vmem:[%s3 + $0x4] sm:$0xf]
      %v662 = vld [vmem:[%s3 + $0x8] sm:$0xf]
      %v663 = vld [vmem:[%s3 + $0xc] sm:$0xf]
      %v664 = vld [vmem:[%s3 + $0x10] sm:$0xf]
      %v665 = vld [vmem:[%s3 + $0x14] sm:$0xf]
      %v666 = vld [vmem:[%s3 + $0x18] sm:$0xf]
      %v667 = vld [vmem:[%s3 + $0x1c] sm:$0xf]
      %v668 = vld [vmem:[%s3 + $0x20] sm:$0xf]
      %v669 = vld [vmem:[%s3 + $0x24] sm:$0xf]
      %v670 = vld [vmem:[%s3 + $0x28] sm:$0xf]
      %v671 = vld [vmem:[%s3 + $0x2c] sm:$0xf]
      %v672 = vld [vmem:[%s3 + $0x30] sm:$0xf]
      %v673 = vld [vmem:[%s3 + $0x34] sm:$0xf]
      %v674 = vld [vmem:[%s3 + $0x38] sm:$0xf]
      %v675 = vld [vmem:[%s3 + $0x3c] sm:$0xf]
      %v676 = vld [vmem:[%s4] sm:$0x1]
      %v677 = vpack.c.bf16 %v629, %v628
      %v678 = vpack.c.bf16 %v631, %v630
      %v679 = vpack.c.bf16 %v633, %v632
      %v680 = vpack.c.bf16 %v635, %v634
      %v681 = vpack.c.bf16 %v637, %v636
      %v682 = vpack.c.bf16 %v639, %v638
      %v683 = vpack.c.bf16 %v641, %v640
      %v684 = vpack.c.bf16 %v643, %v642
      %v685 = vpack.c.bf16 %v645, %v644
      %v686 = vpack.c.bf16 %v647, %v646
      %v687 = vpack.c.bf16 %v649, %v648
      %v688 = vpack.c.bf16 %v651, %v650
      %v689 = vpack.c.bf16 %v653, %v652
      %v690 = vpack.c.bf16 %v655, %v654
      %v691 = vpack.c.bf16 %v657, %v656
      %v692 = vpack.c.bf16 %v659, %v658
      %v694 = vlaneseq
      %v695 = vshrl.u32 %v694, 7
      %v696 = vsub.s32 0, %v695
      %v697 = vrot.slane %v676, %v696
      %v715 = vunpack.c.l.b16 %v660
      %v716 = vunpack.c.l.b16 %v661
      %v717 = vunpack.c.l.b16 %v662
      %v718 = vunpack.c.l.b16 %v663
      %v719 = vunpack.c.l.b16 %v664
      %v720 = vunpack.c.l.b16 %v665
      %v721 = vunpack.c.l.b16 %v666
      %v722 = vunpack.c.l.b16 %v667
      %v723 = vunpack.c.l.b16 %v668
      %v724 = vunpack.c.l.b16 %v669
      %v725 = vunpack.c.l.b16 %v670
      %v726 = vunpack.c.l.b16 %v671
      %v727 = vunpack.c.l.b16 %v672
      %v728 = vunpack.c.l.b16 %v673
      %v729 = vunpack.c.l.b16 %v674
      %v730 = vunpack.c.l.b16 %v675
      %v731 = vpack.c.b16 %v716, %v715
      %v732 = vpack.c.b16 %v718, %v717
      %v733 = vpack.c.b16 %v720, %v719
      %v734 = vpack.c.b16 %v722, %v721
      %v735 = vpack.c.b16 %v724, %v723
      %v736 = vpack.c.b16 %v726, %v725
      %v737 = vpack.c.b16 %v728, %v727
      %v738 = vpack.c.b16 %v730, %v729
      %747 = vmatprep.subr.bf16.mxu0 0
      %748 = vmatpush1.bf16.msra.mxu0 %v731
      %749 = vmatprep.subr.bf16.mxu0 0
      %750 = vmatpush1.bf16.msra.mxu0 %v732
      %751 = vmatprep.subr.bf16.mxu0 0
      %752 = vmatpush1.bf16.msra.mxu0 %v733
      %753 = vmatprep.subr.bf16.mxu0 0
      %754 = vmatpush1.bf16.msra.mxu0 %v734
      %755 = vmatprep.subr.bf16.mxu0 0
      %756 = vmatpush1.bf16.msra.mxu0 %v735
      %757 = vmatprep.subr.bf16.mxu0 0
      %758 = vmatpush1.bf16.msra.mxu0 %v736
      %759 = vmatprep.subr.bf16.mxu0 0
      %760 = vmatpush1.bf16.msra.mxu0 %v737
      %761 = vmatprep.subr.bf16.mxu0 0
      %762 = vmatpush1.bf16.msra.mxu0 %v738
      %763 = vmatprep.subr.bf16.mxu0 0
      %764 = vmatpush1.bf16.msra.mxu0 0
      %765 = vmatprep.subr.bf16.mxu0 0
      %766 = vmatpush1.bf16.msra.mxu0 0
      %767 = vmatprep.subr.bf16.mxu0 0
      %768 = vmatpush1.bf16.msra.mxu0 0
      %769 = vmatprep.subr.bf16.mxu0 0
      %770 = vmatpush1.bf16.msra.mxu0 0
      %771 = vmatprep.subr.bf16.mxu0 0
      %772 = vmatpush1.bf16.msra.mxu0 0
      %773 = vmatprep.subr.bf16.mxu0 0
      %774 = vmatpush1.bf16.msra.mxu0 0
      %775 = vmatprep.subr.bf16.mxu0 0
      %776 = vmatpush1.bf16.msra.mxu0 0
      %777 = vmatprep.subr.bf16.mxu0 0
      %778 = vmatpush1.bf16.msra.mxu0 0
      %779 = vmatprep.mubr.bf16.mxu0 0
      %780 = vmatmul.mubr.bf16.gmra.mrb[0].mxu0 %v677
      %v781 = vpop.f32.mrb[0].mxu0
      %v782 = vadd.f32 %v697, %v781
      %v783 = vpop.f32.mrb[0].mxu0
      %v784 = vpop.f32.mrb[0].mxu0
      %v785 = vadd.f32 %v697, %v784
      %v786 = vpop.f32.mrb[0].mxu0
      %787 = vmatprep.mubr.bf16.mxu0 0
      %788 = vmatmul.mubr.bf16.gmra.mrb[0].mxu0 %v678
      %v789 = vpop.f32.mrb[0].mxu0
      %v790 = vadd.f32 %v697, %v789
      %v791 = vpop.f32.mrb[0].mxu0
      %v792 = vpop.f32.mrb[0].mxu0
      %v793 = vadd.f32 %v697, %v792
      %v794 = vpop.f32.mrb[0].mxu0
      %795 = vmatprep.mubr.bf16.mxu0 0
      %796 = vmatmul.mubr.bf16.gmra.mrb[0].mxu0 %v679
      %v797 = vpop.f32.mrb[0].mxu0
      %v798 = vadd.f32 %v697, %v797
      %v799 = vpop.f32.mrb[0].mxu0
      %v800 = vpop.f32.mrb[0].mxu0
      %v801 = vadd.f32 %v697, %v800
      %v802 = vpop.f32.mrb[0].mxu0
      %803 = vmatprep.mubr.bf16.mxu0 0
      %804 = vmatmul.mubr.bf16.gmra.mrb[0].mxu0 %v680
      %v805 = vpop.f32.mrb[0].mxu0
      %v806 = vadd.f32 %v697, %v805
      %v807 = vpop.f32.mrb[0].mxu0
      %v808 = vpop.f32.mrb[0].mxu0
      %v809 = vadd.f32 %v697, %v808
      %v810 = vpop.f32.mrb[0].mxu0
      %811 = vmatprep.mubr.bf16.mxu0 0
      %812 = vmatmul.mubr.bf16.gmra.mrb[0].mxu0 %v681
      %v813 = vpop.f32.mrb[0].mxu0
      %v814 = vadd.f32 %v697, %v813
      %v815 = vpop.f32.mrb[0].mxu0
      %v816 = vpop.f32.mrb[0].mxu0
      %v817 = vadd.f32 %v697, %v816
      %v818 = vpop.f32.mrb[0].mxu0
      %819 = vmatprep.mubr.bf16.mxu0 0
      %820 = vmatmul.mubr.bf16.gmra.mrb[0].mxu0 %v682
      %v821 = vpop.f32.mrb[0].mxu0
      %v822 = vadd.f32 %v697, %v821
      %v823 = vpop.f32.mrb[0].mxu0
      %v824 = vpop.f32.mrb[0].mxu0
      %v825 = vadd.f32 %v697, %v824
      %v826 = vpop.f32.mrb[0].mxu0
      %827 = vmatprep.mubr.bf16.mxu0 0
      %828 = vmatmul.mubr.bf16.gmra.mrb[0].mxu0 %v683
      %v829 = vpop.f32.mrb[0].mxu0
      %v830 = vadd.f32 %v697, %v829
      %v831 = vpop.f32.mrb[0].mxu0
      %v832 = vpop.f32.mrb[0].mxu0
      %v833 = vadd.f32 %v697, %v832
      %v834 = vpop.f32.mrb[0].mxu0
      %835 = vmatprep.mubr.bf16.mxu0 0
      %836 = vmatmul.mubr.bf16.gmra.mrb[0].mxu0 %v684
      %v837 = vpop.f32.mrb[0].mxu0
      %v838 = vadd.f32 %v697, %v837
      %v839 = vpop.f32.mrb[0].mxu0
      %v840 = vpop.f32.mrb[0].mxu0
      %v841 = vadd.f32 %v697, %v840
      %v842 = vpop.f32.mrb[0].mxu0
      %843 = vmatprep.mubr.bf16.mxu0 0
      %844 = vmatmul.mubr.bf16.gmra.mrb[0].mxu0 %v685
      %v845 = vpop.f32.mrb[0].mxu0
      %v846 = vadd.f32 %v697, %v845
      %v847 = vpop.f32.mrb[0].mxu0
      %v848 = vpop.f32.mrb[0].mxu0
      %v849 = vadd.f32 %v697, %v848
      %v850 = vpop.f32.mrb[0].mxu0
      %851 = vmatprep.mubr.bf16.mxu0 0
      %852 = vmatmul.mubr.bf16.gmra.mrb[0].mxu0 %v686
      %v853 = vpop.f32.mrb[0].mxu0
      %v854 = vadd.f32 %v697, %v853
      %v855 = vpop.f32.mrb[0].mxu0
      %v856 = vpop.f32.mrb[0].mxu0
      %v857 = vadd.f32 %v697, %v856
      %v858 = vpop.f32.mrb[0].mxu0
      %859 = vmatprep.mubr.bf16.mxu0 0
      %860 = vmatmul.mubr.bf16.gmra.mrb[0].mxu0 %v687
      %v861 = vpop.f32.mrb[0].mxu0
      %v862 = vadd.f32 %v697, %v861
      %v863 = vpop.f32.mrb[0].mxu0
      %v864 = vpop.f32.mrb[0].mxu0
      %v865 = vadd.f32 %v697, %v864
      %v866 = vpop.f32.mrb[0].mxu0
      %867 = vmatprep.mubr.bf16.mxu0 0
      %868 = vmatmul.mubr.bf16.gmra.mrb[0].mxu0 %v688
      %v869 = vpop.f32.mrb[0].mxu0
      %v870 = vadd.f32 %v697, %v869
      %v871 = vpop.f32.mrb[0].mxu0
      %v872 = vpop.f32.mrb[0].mxu0
      %v873 = vadd.f32 %v697, %v872
      %v874 = vpop.f32.mrb[0].mxu0
      %875 = vmatprep.mubr.bf16.mxu0 0
      %876 = vmatmul.mubr.bf16.gmra.mrb[0].mxu0 %v689
      %v877 = vpop.f32.mrb[0].mxu0
      %v878 = vadd.f32 %v697, %v877
      %v879 = vpop.f32.mrb[0].mxu0
      %v880 = vpop.f32.mrb[0].mxu0
      %v881 = vadd.f32 %v697, %v880
      %v882 = vpop.f32.mrb[0].mxu0
      %883 = vmatprep.mubr.bf16.mxu0 0
      %884 = vmatmul.mubr.bf16.gmra.mrb[0].mxu0 %v690
      %v885 = vpop.f32.mrb[0].mxu0
      %v886 = vadd.f32 %v697, %v885
      %v887 = vpop.f32.mrb[0].mxu0
      %v888 = vpop.f32.mrb[0].mxu0
      %v889 = vadd.f32 %v697, %v888
      %v890 = vpop.f32.mrb[0].mxu0
      %891 = vmatprep.mubr.bf16.mxu0 0
      %892 = vmatmul.mubr.bf16.gmra.mrb[0].mxu0 %v691
      %v893 = vpop.f32.mrb[0].mxu0
      %v894 = vadd.f32 %v697, %v893
      %v895 = vpop.f32.mrb[0].mxu0
      %v896 = vpop.f32.mrb[0].mxu0
      %v897 = vadd.f32 %v697, %v896
      %v898 = vpop.f32.mrb[0].mxu0
      %899 = vmatprep.mubr.bf16.mxu0 0
      %900 = vmatmul.mubr.bf16.gmra.mrb[0].mxu0 %v692
      %v901 = vpop.f32.mrb[0].mxu0
      %v902 = vadd.f32 %v697, %v901
      %v903 = vpop.f32.mrb[0].mxu0
      %v904 = vpop.f32.mrb[0].mxu0
      %v905 = vadd.f32 %v697, %v904
      %v906 = vpop.f32.mrb[0].mxu0
      %907 = vdwg.mxu0
      %v908 = vtanh.pop %v782
      %v909 = vtanh.pop %v785
      %v910 = vtanh.pop %v790
      %v911 = vtanh.pop %v793
      %v912 = vtanh.pop %v798
      %v913 = vtanh.pop %v801
      %v914 = vtanh.pop %v806
      %v915 = vtanh.pop %v809
      %v916 = vtanh.pop %v814
      %v917 = vtanh.pop %v817
      %v918 = vtanh.pop %v822
      %v919 = vtanh.pop %v825
      %v920 = vtanh.pop %v830
      %v921 = vtanh.pop %v833
      %v922 = vtanh.pop %v838
      %v923 = vtanh.pop %v841
      %v924 = vtanh.pop %v846
      %v925 = vtanh.pop %v849
      %v926 = vtanh.pop %v854
      %v927 = vtanh.pop %v857
      %v928 = vtanh.pop %v862
      %v929 = vtanh.pop %v865
      %v930 = vtanh.pop %v870
      %v931 = vtanh.pop %v873
      %v932 = vtanh.pop %v878
      %v933 = vtanh.pop %v881
      %v934 = vtanh.pop %v886
      %v935 = vtanh.pop %v889
      %v936 = vtanh.pop %v894
      %v937 = vtanh.pop %v897
      %v938 = vtanh.pop %v902
      %v939 = vtanh.pop %v905
      %v940 = vld [vmem:[%s5] sm:$0xf]
      %v941 = vld [vmem:[%s5 + $0x4] sm:$0xf]
      %v942 = vld [vmem:[%s5 + $0x8] sm:$0xf]
      %v943 = vld [vmem:[%s5 + $0xc] sm:$0xf]
      %v944 = vld [vmem:[%s5 + $0x10] sm:$0xf]
      %v945 = vld [vmem:[%s5 + $0x14] sm:$0xf]
      %v946 = vld [vmem:[%s5 + $0x18] sm:$0xf]
      %v947 = vld [vmem:[%s5 + $0x1c] sm:$0xf]
      %v948 = vld [vmem:[%s5 + $0x20] sm:$0xf]
      %v949 = vld [vmem:[%s5 + $0x24] sm:$0xf]
      %v950 = vld [vmem:[%s5 + $0x28] sm:$0xf]
      %v951 = vld [vmem:[%s5 + $0x2c] sm:$0xf]
      %v952 = vld [vmem:[%s5 + $0x30] sm:$0xf]
      %v953 = vld [vmem:[%s5 + $0x34] sm:$0xf]
      %v954 = vld [vmem:[%s5 + $0x38] sm:$0xf]
      %v955 = vld [vmem:[%s5 + $0x3c] sm:$0xf]
      %v956 = vld [vmem:[%s6] sm:$0x1]
      %v957 = vpack.c.bf16 %v909, %v908
      %v958 = vpack.c.bf16 %v911, %v910
      %v959 = vpack.c.bf16 %v913, %v912
      %v960 = vpack.c.bf16 %v915, %v914
      %v961 = vpack.c.bf16 %v917, %v916
      %v962 = vpack.c.bf16 %v919, %v918
      %v963 = vpack.c.bf16 %v921, %v920
      %v964 = vpack.c.bf16 %v923, %v922
      %v965 = vpack.c.bf16 %v925, %v924
      %v966 = vpack.c.bf16 %v927, %v926
      %v967 = vpack.c.bf16 %v929, %v928
      %v968 = vpack.c.bf16 %v931, %v930
      %v969 = vpack.c.bf16 %v933, %v932
      %v970 = vpack.c.bf16 %v935, %v934
      %v971 = vpack.c.bf16 %v937, %v936
      %v972 = vpack.c.bf16 %v939, %v938
      %v974 = vlaneseq
      %v975 = vshrl.u32 %v974, 7
      %v976 = vsub.s32 0, %v975
      %v977 = vrot.slane %v956, %v976
      %v995 = vunpack.c.l.b16 %v940
      %v996 = vunpack.c.l.b16 %v941
      %v997 = vunpack.c.l.b16 %v942
      %v998 = vunpack.c.l.b16 %v943
      %v999 = vunpack.c.l.b16 %v944
      %v1000 = vunpack.c.l.b16 %v945
      %v1001 = vunpack.c.l.b16 %v946
      %v1002 = vunpack.c.l.b16 %v947
      %v1003 = vunpack.c.l.b16 %v948
      %v1004 = vunpack.c.l.b16 %v949
      %v1005 = vunpack.c.l.b16 %v950
      %v1006 = vunpack.c.l.b16 %v951
      %v1007 = vunpack.c.l.b16 %v952
      %v1008 = vunpack.c.l.b16 %v953
      %v1009 = vunpack.c.l.b16 %v954
      %v1010 = vunpack.c.l.b16 %v955
      %v1011 = vpack.c.b16 %v996, %v995
      %v1012 = vpack.c.b16 %v998, %v997
      %v1013 = vpack.c.b16 %v1000, %v999
      %v1014 = vpack.c.b16 %v1002, %v1001
      %v1015 = vpack.c.b16 %v1004, %v1003
      %v1016 = vpack.c.b16 %v1006, %v1005
      %v1017 = vpack.c.b16 %v1008, %v1007
      %v1018 = vpack.c.b16 %v1010, %v1009
      %1027 = vmatprep.subr.bf16.mxu0 0
      %1028 = vmatpush1.bf16.msra.mxu0 %v1011
      %1029 = vmatprep.subr.bf16.mxu0 0
      %1030 = vmatpush1.bf16.msra.mxu0 %v1012
      %1031 = vmatprep.subr.bf16.mxu0 0
      %1032 = vmatpush1.bf16.msra.mxu0 %v1013
      %1033 = vmatprep.subr.bf16.mxu0 0
      %1034 = vmatpush1.bf16.msra.mxu0 %v1014
      %1035 = vmatprep.subr.bf16.mxu0 0
      %1036 = vmatpush1.bf16.msra.mxu0 %v1015
      %1037 = vmatprep.subr.bf16.mxu0 0
      %1038 = vmatpush1.bf16.msra.mxu0 %v1016
      %1039 = vmatprep.subr.bf16.mxu0 0
      %1040 = vmatpush1.bf16.msra.mxu0 %v1017
      %1041 = vmatprep.subr.bf16.mxu0 0
      %1042 = vmatpush1.bf16.msra.mxu0 %v1018
      %1043 = vmatprep.subr.bf16.mxu0 0
      %1044 = vmatpush1.bf16.msra.mxu0 0
      %1045 = vmatprep.subr.bf16.mxu0 0
      %1046 = vmatpush1.bf16.msra.mxu0 0
      %1047 = vmatprep.subr.bf16.mxu0 0
      %1048 = vmatpush1.bf16.msra.mxu0 0
      %1049 = vmatprep.subr.bf16.mxu0 0
      %1050 = vmatpush1.bf16.msra.mxu0 0
      %1051 = vmatprep.subr.bf16.mxu0 0
      %1052 = vmatpush1.bf16.msra.mxu0 0
      %1053 = vmatprep.subr.bf16.mxu0 0
      %1054 = vmatpush1.bf16.msra.mxu0 0
      %1055 = vmatprep.subr.bf16.mxu0 0
      %1056 = vmatpush1.bf16.msra.mxu0 0
      %1057 = vmatprep.subr.bf16.mxu0 0
      %1058 = vmatpush1.bf16.msra.mxu0 0
      %1059 = vmatprep.mubr.bf16.mxu0 0
      %1060 = vmatmul.mubr.bf16.gmra.mrb[0].mxu0 %v957
      %v1061 = vpop.f32.mrb[0].mxu0
      %v1062 = vadd.f32 %v977, %v1061
      %v1063 = vpop.f32.mrb[0].mxu0
      %v1064 = vpop.f32.mrb[0].mxu0
      %v1065 = vadd.f32 %v977, %v1064
      %v1066 = vpop.f32.mrb[0].mxu0
      %1067 = vmatprep.mubr.bf16.mxu0 0
      %1068 = vmatmul.mubr.bf16.gmra.mrb[0].mxu0 %v958
      %v1069 = vpop.f32.mrb[0].mxu0
      %v1070 = vadd.f32 %v977, %v1069
      %v1071 = vpop.f32.mrb[0].mxu0
      %v1072 = vpop.f32.mrb[0].mxu0
      %v1073 = vadd.f32 %v977, %v1072
      %v1074 = vpop.f32.mrb[0].mxu0
      %1075 = vmatprep.mubr.bf16.mxu0 0
      %1076 = vmatmul.mubr.bf16.gmra.mrb[0].mxu0 %v959
      %v1077 = vpop.f32.mrb[0].mxu0
      %v1078 = vadd.f32 %v977, %v1077
      %v1079 = vpop.f32.mrb[0].mxu0
      %v1080 = vpop.f32.mrb[0].mxu0
      %v1081 = vadd.f32 %v977, %v1080
      %v1082 = vpop.f32.mrb[0].mxu0
      %1083 = vmatprep.mubr.bf16.mxu0 0
      %1084 = vmatmul.mubr.bf16.gmra.mrb[0].mxu0 %v960
      %v1085 = vpop.f32.mrb[0].mxu0
      %v1086 = vadd.f32 %v977, %v1085
      %v1087 = vpop.f32.mrb[0].mxu0
      %v1088 = vpop.f32.mrb[0].mxu0
      %v1089 = vadd.f32 %v977, %v1088
      %v1090 = vpop.f32.mrb[0].mxu0
      %1091 = vmatprep.mubr.bf16.mxu0 0
      %1092 = vmatmul.mubr.bf16.gmra.mrb[0].mxu0 %v961
      %v1093 = vpop.f32.mrb[0].mxu0
      %v1094 = vadd.f32 %v977, %v1093
      %v1095 = vpop.f32.mrb[0].mxu0
      %v1096 = vpop.f32.mrb[0].mxu0
      %v1097 = vadd.f32 %v977, %v1096
      %v1098 = vpop.f32.mrb[0].mxu0
      %1099 = vmatprep.mubr.bf16.mxu0 0
      %1100 = vmatmul.mubr.bf16.gmra.mrb[0].mxu0 %v962
      %v1101 = vpop.f32.mrb[0].mxu0
      %v1102 = vadd.f32 %v977, %v1101
      %v1103 = vpop.f32.mrb[0].mxu0
      %v1104 = vpop.f32.mrb[0].mxu0
      %v1105 = vadd.f32 %v977, %v1104
      %v1106 = vpop.f32.mrb[0].mxu0
      %1107 = vmatprep.mubr.bf16.mxu0 0
      %1108 = vmatmul.mubr.bf16.gmra.mrb[0].mxu0 %v963
      %v1109 = vpop.f32.mrb[0].mxu0
      %v1110 = vadd.f32 %v977, %v1109
      %v1111 = vpop.f32.mrb[0].mxu0
      %v1112 = vpop.f32.mrb[0].mxu0
      %v1113 = vadd.f32 %v977, %v1112
      %v1114 = vpop.f32.mrb[0].mxu0
      %1115 = vmatprep.mubr.bf16.mxu0 0
      %1116 = vmatmul.mubr.bf16.gmra.mrb[0].mxu0 %v964
      %v1117 = vpop.f32.mrb[0].mxu0
      %v1118 = vadd.f32 %v977, %v1117
      %v1119 = vpop.f32.mrb[0].mxu0
      %v1120 = vpop.f32.mrb[0].mxu0
      %v1121 = vadd.f32 %v977, %v1120
      %v1122 = vpop.f32.mrb[0].mxu0
      %1123 = vmatprep.mubr.bf16.mxu0 0
      %1124 = vmatmul.mubr.bf16.gmra.mrb[0].mxu0 %v965
      %v1125 = vpop.f32.mrb[0].mxu0
      %v1126 = vadd.f32 %v977, %v1125
      %v1127 = vpop.f32.mrb[0].mxu0
      %v1128 = vpop.f32.mrb[0].mxu0
      %v1129 = vadd.f32 %v977, %v1128
      %v1130 = vpop.f32.mrb[0].mxu0
      %1131 = vmatprep.mubr.bf16.mxu0 0
      %1132 = vmatmul.mubr.bf16.gmra.mrb[0].mxu0 %v966
      %v1133 = vpop.f32.mrb[0].mxu0
      %v1134 = vadd.f32 %v977, %v1133
      %v1135 = vpop.f32.mrb[0].mxu0
      %v1136 = vpop.f32.mrb[0].mxu0
      %v1137 = vadd.f32 %v977, %v1136
      %v1138 = vpop.f32.mrb[0].mxu0
      %1139 = vmatprep.mubr.bf16.mxu0 0
      %1140 = vmatmul.mubr.bf16.gmra.mrb[0].mxu0 %v967
      %v1141 = vpop.f32.mrb[0].mxu0
      %v1142 = vadd.f32 %v977, %v1141
      %v1143 = vpop.f32.mrb[0].mxu0
      %v1144 = vpop.f32.mrb[0].mxu0
      %v1145 = vadd.f32 %v977, %v1144
      %v1146 = vpop.f32.mrb[0].mxu0
      %1147 = vmatprep.mubr.bf16.mxu0 0
      %1148 = vmatmul.mubr.bf16.gmra.mrb[0].mxu0 %v968
      %v1149 = vpop.f32.mrb[0].mxu0
      %v1150 = vadd.f32 %v977, %v1149
      %v1151 = vpop.f32.mrb[0].mxu0
      %v1152 = vpop.f32.mrb[0].mxu0
      %v1153 = vadd.f32 %v977, %v1152
      %v1154 = vpop.f32.mrb[0].mxu0
      %1155 = vmatprep.mubr.bf16.mxu0 0
      %1156 = vmatmul.mubr.bf16.gmra.mrb[0].mxu0 %v969
      %v1157 = vpop.f32.mrb[0].mxu0
      %v1158 = vadd.f32 %v977, %v1157
      %v1159 = vpop.f32.mrb[0].mxu0
      %v1160 = vpop.f32.mrb[0].mxu0
      %v1161 = vadd.f32 %v977, %v1160
      %v1162 = vpop.f32.mrb[0].mxu0
      %1163 = vmatprep.mubr.bf16.mxu0 0
      %1164 = vmatmul.mubr.bf16.gmra.mrb[0].mxu0 %v970
      %v1165 = vpop.f32.mrb[0].mxu0
      %v1166 = vadd.f32 %v977, %v1165
      %v1167 = vpop.f32.mrb[0].mxu0
      %v1168 = vpop.f32.mrb[0].mxu0
      %v1169 = vadd.f32 %v977, %v1168
      %v1170 = vpop.f32.mrb[0].mxu0
      %1171 = vmatprep.mubr.bf16.mxu0 0
      %1172 = vmatmul.mubr.bf16.gmra.mrb[0].mxu0 %v971
      %v1173 = vpop.f32.mrb[0].mxu0
      %v1174 = vadd.f32 %v977, %v1173
      %v1175 = vpop.f32.mrb[0].mxu0
      %v1176 = vpop.f32.mrb[0].mxu0
      %v1177 = vadd.f32 %v977, %v1176
      %v1178 = vpop.f32.mrb[0].mxu0
      %1179 = vmatprep.mubr.bf16.mxu0 0
      %1180 = vmatmul.mubr.bf16.gmra.mrb[0].mxu0 %v972
      %v1181 = vpop.f32.mrb[0].mxu0
      %v1182 = vadd.f32 %v977, %v1181
      %v1183 = vpop.f32.mrb[0].mxu0
      %v1184 = vpop.f32.mrb[0].mxu0
      %v1185 = vadd.f32 %v977, %v1184
      %v1186 = vpop.f32.mrb[0].mxu0
      %1187 = vdwg.mxu0
      %v1188 = vlaneseq
      %v1189 = vand.u32 %v1188, 127
      %vm1190 = vcmp.lt.s32.totalorder %v1189, 16
      %v1191 = vsel %vm1190, %v1062, -1e+30
      %v1192 = vsel %vm1190, %v1065, -1e+30
      %v1193 = vsel %vm1190, %v1070, -1e+30
      %v1194 = vsel %vm1190, %v1073, -1e+30
      %v1195 = vsel %vm1190, %v1078, -1e+30
      %v1196 = vsel %vm1190, %v1081, -1e+30
      %v1197 = vsel %vm1190, %v1086, -1e+30
      %v1198 = vsel %vm1190, %v1089, -1e+30
      %v1199 = vsel %vm1190, %v1094, -1e+30
      %v1200 = vsel %vm1190, %v1097, -1e+30
      %v1201 = vsel %vm1190, %v1102, -1e+30
      %v1202 = vsel %vm1190, %v1105, -1e+30
      %v1203 = vsel %vm1190, %v1110, -1e+30
      %v1204 = vsel %vm1190, %v1113, -1e+30
      %v1205 = vsel %vm1190, %v1118, -1e+30
      %v1206 = vsel %vm1190, %v1121, -1e+30
      %v1207 = vsel %vm1190, %v1126, -1e+30
      %v1208 = vsel %vm1190, %v1129, -1e+30
      %v1209 = vsel %vm1190, %v1134, -1e+30
      %v1210 = vsel %vm1190, %v1137, -1e+30
      %v1211 = vsel %vm1190, %v1142, -1e+30
      %v1212 = vsel %vm1190, %v1145, -1e+30
      %v1213 = vsel %vm1190, %v1150, -1e+30
      %v1214 = vsel %vm1190, %v1153, -1e+30
      %v1215 = vsel %vm1190, %v1158, -1e+30
      %v1216 = vsel %vm1190, %v1161, -1e+30
      %v1217 = vsel %vm1190, %v1166, -1e+30
      %v1218 = vsel %vm1190, %v1169, -1e+30
      %v1219 = vsel %vm1190, %v1174, -1e+30
      %v1220 = vsel %vm1190, %v1177, -1e+30
      %v1221 = vsel %vm1190, %v1182, -1e+30
      %v1222 = vsel %vm1190, %v1185, -1e+30
      %1223 = vmax.xlane.f32.xlu0 %v1191
      %v1224 = vpop.xlane.xlu0 %1223
      %1225 = vmax.xlane.f32.xlu0 %v1192
      %v1226 = vpop.xlane.xlu0 %1225
      %1227 = vmax.xlane.f32.xlu0 %v1193
      %v1228 = vpop.xlane.xlu0 %1227
      %1229 = vmax.xlane.f32.xlu0 %v1194
      %v1230 = vpop.xlane.xlu0 %1229
      %1231 = vmax.xlane.f32.xlu0 %v1195
      %v1232 = vpop.xlane.xlu0 %1231
      %1233 = vmax.xlane.f32.xlu0 %v1196
      %v1234 = vpop.xlane.xlu0 %1233
      %1235 = vmax.xlane.f32.xlu0 %v1197
      %v1236 = vpop.xlane.xlu0 %1235
      %1237 = vmax.xlane.f32.xlu0 %v1198
      %v1238 = vpop.xlane.xlu0 %1237
      %1239 = vmax.xlane.f32.xlu0 %v1199
      %v1240 = vpop.xlane.xlu0 %1239
      %1241 = vmax.xlane.f32.xlu0 %v1200
      %v1242 = vpop.xlane.xlu0 %1241
      %1243 = vmax.xlane.f32.xlu0 %v1201
      %v1244 = vpop.xlane.xlu0 %1243
      %1245 = vmax.xlane.f32.xlu0 %v1202
      %v1246 = vpop.xlane.xlu0 %1245
      %1247 = vmax.xlane.f32.xlu0 %v1203
      %v1248 = vpop.xlane.xlu0 %1247
      %1249 = vmax.xlane.f32.xlu0 %v1204
      %v1250 = vpop.xlane.xlu0 %1249
      %1251 = vmax.xlane.f32.xlu0 %v1205
      %v1252 = vpop.xlane.xlu0 %1251
      %1253 = vmax.xlane.f32.xlu0 %v1206
      %v1254 = vpop.xlane.xlu0 %1253
      %1255 = vmax.xlane.f32.xlu0 %v1207
      %v1256 = vpop.xlane.xlu0 %1255
      %1257 = vmax.xlane.f32.xlu0 %v1208
      %v1258 = vpop.xlane.xlu0 %1257
      %1259 = vmax.xlane.f32.xlu0 %v1209
      %v1260 = vpop.xlane.xlu0 %1259
      %1261 = vmax.xlane.f32.xlu0 %v1210
      %v1262 = vpop.xlane.xlu0 %1261
      %1263 = vmax.xlane.f32.xlu0 %v1211
      %v1264 = vpop.xlane.xlu0 %1263
      %1265 = vmax.xlane.f32.xlu0 %v1212
      %v1266 = vpop.xlane.xlu0 %1265
      %1267 = vmax.xlane.f32.xlu0 %v1213
      %v1268 = vpop.xlane.xlu0 %1267
      %1269 = vmax.xlane.f32.xlu0 %v1214
      %v1270 = vpop.xlane.xlu0 %1269
      %1271 = vmax.xlane.f32.xlu0 %v1215
      %v1272 = vpop.xlane.xlu0 %1271
      %1273 = vmax.xlane.f32.xlu0 %v1216
      %v1274 = vpop.xlane.xlu0 %1273
      %1275 = vmax.xlane.f32.xlu0 %v1217
      %v1276 = vpop.xlane.xlu0 %1275
      %1277 = vmax.xlane.f32.xlu0 %v1218
      %v1278 = vpop.xlane.xlu0 %1277
      %1279 = vmax.xlane.f32.xlu0 %v1219
      %v1280 = vpop.xlane.xlu0 %1279
      %1281 = vmax.xlane.f32.xlu0 %v1220
      %v1282 = vpop.xlane.xlu0 %1281
      %1283 = vmax.xlane.f32.xlu0 %v1221
      %v1284 = vpop.xlane.xlu0 %1283
      %1285 = vmax.xlane.f32.xlu0 %v1222
      %v1286 = vpop.xlane.xlu0 %1285
      %v1287 = vsub.f32 %v1191, %v1224
      %v1288 = vsub.f32 %v1192, %v1226
      %v1289 = vsub.f32 %v1193, %v1228
      %v1290 = vsub.f32 %v1194, %v1230
      %v1291 = vsub.f32 %v1195, %v1232
      %v1292 = vsub.f32 %v1196, %v1234
      %v1293 = vsub.f32 %v1197, %v1236
      %v1294 = vsub.f32 %v1198, %v1238
      %v1295 = vsub.f32 %v1199, %v1240
      %v1296 = vsub.f32 %v1200, %v1242
      %v1297 = vsub.f32 %v1201, %v1244
      %v1298 = vsub.f32 %v1202, %v1246
      %v1299 = vsub.f32 %v1203, %v1248
      %v1300 = vsub.f32 %v1204, %v1250
      %v1301 = vsub.f32 %v1205, %v1252
      %v1302 = vsub.f32 %v1206, %v1254
      %v1303 = vsub.f32 %v1207, %v1256
      %v1304 = vsub.f32 %v1208, %v1258
      %v1305 = vsub.f32 %v1209, %v1260
      %v1306 = vsub.f32 %v1210, %v1262
      %v1307 = vsub.f32 %v1211, %v1264
      %v1308 = vsub.f32 %v1212, %v1266
      %v1309 = vsub.f32 %v1213, %v1268
      %v1310 = vsub.f32 %v1214, %v1270
      %v1311 = vsub.f32 %v1215, %v1272
      %v1312 = vsub.f32 %v1216, %v1274
      %v1313 = vsub.f32 %v1217, %v1276
      %v1314 = vsub.f32 %v1218, %v1278
      %v1315 = vsub.f32 %v1219, %v1280
      %v1316 = vsub.f32 %v1220, %v1282
      %v1317 = vsub.f32 %v1221, %v1284
      %v1318 = vsub.f32 %v1222, %v1286
      %v1319 = vmul.f32 %v1287, 1.442695
      %v1320 = vpow.pop %v1319
      %v1321 = vmul.f32 %v1288, 1.442695
      %v1322 = vpow.pop %v1321
      %v1323 = vmul.f32 %v1289, 1.442695
      %v1324 = vpow.pop %v1323
      %v1325 = vmul.f32 %v1290, 1.442695
      %v1326 = vpow.pop %v1325
      %v1327 = vmul.f32 %v1291, 1.442695
      %v1328 = vpow.pop %v1327
      %v1329 = vmul.f32 %v1292, 1.442695
      %v1330 = vpow.pop %v1329
      %v1331 = vmul.f32 %v1293, 1.442695
      %v1332 = vpow.pop %v1331
      %v1333 = vmul.f32 %v1294, 1.442695
      %v1334 = vpow.pop %v1333
      %v1335 = vmul.f32 %v1295, 1.442695
      %v1336 = vpow.pop %v1335
      %v1337 = vmul.f32 %v1296, 1.442695
      %v1338 = vpow.pop %v1337
      %v1339 = vmul.f32 %v1297, 1.442695
      %v1340 = vpow.pop %v1339
      %v1341 = vmul.f32 %v1298, 1.442695
      %v1342 = vpow.pop %v1341
      %v1343 = vmul.f32 %v1299, 1.442695
      %v1344 = vpow.pop %v1343
      %v1345 = vmul.f32 %v1300, 1.442695
      %v1346 = vpow.pop %v1345
      %v1347 = vmul.f32 %v1301, 1.442695
      %v1348 = vpow.pop %v1347
      %v1349 = vmul.f32 %v1302, 1.442695
      %v1350 = vpow.pop %v1349
      %v1351 = vmul.f32 %v1303, 1.442695
      %v1352 = vpow.pop %v1351
      %v1353 = vmul.f32 %v1304, 1.442695
      %v1354 = vpow.pop %v1353
      %v1355 = vmul.f32 %v1305, 1.442695
      %v1356 = vpow.pop %v1355
      %v1357 = vmul.f32 %v1306, 1.442695
      %v1358 = vpow.pop %v1357
      %v1359 = vmul.f32 %v1307, 1.442695
      %v1360 = vpow.pop %v1359
      %v1361 = vmul.f32 %v1308, 1.442695
      %v1362 = vpow.pop %v1361
      %v1363 = vmul.f32 %v1309, 1.442695
      %v1364 = vpow.pop %v1363
      %v1365 = vmul.f32 %v1310, 1.442695
      %v1366 = vpow.pop %v1365
      %v1367 = vmul.f32 %v1311, 1.442695
      %v1368 = vpow.pop %v1367
      %v1369 = vmul.f32 %v1312, 1.442695
      %v1370 = vpow.pop %v1369
      %v1371 = vmul.f32 %v1313, 1.442695
      %v1372 = vpow.pop %v1371
      %v1373 = vmul.f32 %v1314, 1.442695
      %v1374 = vpow.pop %v1373
      %v1375 = vmul.f32 %v1315, 1.442695
      %v1376 = vpow.pop %v1375
      %v1377 = vmul.f32 %v1316, 1.442695
      %v1378 = vpow.pop %v1377
      %v1379 = vmul.f32 %v1317, 1.442695
      %v1380 = vpow.pop %v1379
      %v1381 = vmul.f32 %v1318, 1.442695
      %v1382 = vpow.pop %v1381
      %1383 = vadd.xlane.f32.xlu0 %v1320
      %v1384 = vpop.xlane.xlu0 %1383
      %1385 = vadd.xlane.f32.xlu0 %v1322
      %v1386 = vpop.xlane.xlu0 %1385
      %1387 = vadd.xlane.f32.xlu0 %v1324
      %v1388 = vpop.xlane.xlu0 %1387
      %1389 = vadd.xlane.f32.xlu0 %v1326
      %v1390 = vpop.xlane.xlu0 %1389
      %1391 = vadd.xlane.f32.xlu0 %v1328
      %v1392 = vpop.xlane.xlu0 %1391
      %1393 = vadd.xlane.f32.xlu0 %v1330
      %v1394 = vpop.xlane.xlu0 %1393
      %1395 = vadd.xlane.f32.xlu0 %v1332
      %v1396 = vpop.xlane.xlu0 %1395
      %1397 = vadd.xlane.f32.xlu0 %v1334
      %v1398 = vpop.xlane.xlu0 %1397
      %1399 = vadd.xlane.f32.xlu0 %v1336
      %v1400 = vpop.xlane.xlu0 %1399
      %1401 = vadd.xlane.f32.xlu0 %v1338
      %v1402 = vpop.xlane.xlu0 %1401
      %1403 = vadd.xlane.f32.xlu0 %v1340
      %v1404 = vpop.xlane.xlu0 %1403
      %1405 = vadd.xlane.f32.xlu0 %v1342
      %v1406 = vpop.xlane.xlu0 %1405
      %1407 = vadd.xlane.f32.xlu0 %v1344
      %v1408 = vpop.xlane.xlu0 %1407
      %1409 = vadd.xlane.f32.xlu0 %v1346
      %v1410 = vpop.xlane.xlu0 %1409
      %1411 = vadd.xlane.f32.xlu0 %v1348
      %v1412 = vpop.xlane.xlu0 %1411
      %1413 = vadd.xlane.f32.xlu0 %v1350
      %v1414 = vpop.xlane.xlu0 %1413
      %1415 = vadd.xlane.f32.xlu0 %v1352
      %v1416 = vpop.xlane.xlu0 %1415
      %1417 = vadd.xlane.f32.xlu0 %v1354
      %v1418 = vpop.xlane.xlu0 %1417
      %1419 = vadd.xlane.f32.xlu0 %v1356
      %v1420 = vpop.xlane.xlu0 %1419
      %1421 = vadd.xlane.f32.xlu0 %v1358
      %v1422 = vpop.xlane.xlu0 %1421
      %1423 = vadd.xlane.f32.xlu0 %v1360
      %v1424 = vpop.xlane.xlu0 %1423
      %1425 = vadd.xlane.f32.xlu0 %v1362
      %v1426 = vpop.xlane.xlu0 %1425
      %1427 = vadd.xlane.f32.xlu0 %v1364
      %v1428 = vpop.xlane.xlu0 %1427
      %1429 = vadd.xlane.f32.xlu0 %v1366
      %v1430 = vpop.xlane.xlu0 %1429
      %1431 = vadd.xlane.f32.xlu0 %v1368
      %v1432 = vpop.xlane.xlu0 %1431
      %1433 = vadd.xlane.f32.xlu0 %v1370
      %v1434 = vpop.xlane.xlu0 %1433
      %1435 = vadd.xlane.f32.xlu0 %v1372
      %v1436 = vpop.xlane.xlu0 %1435
      %1437 = vadd.xlane.f32.xlu0 %v1374
      %v1438 = vpop.xlane.xlu0 %1437
      %1439 = vadd.xlane.f32.xlu0 %v1376
      %v1440 = vpop.xlane.xlu0 %1439
      %1441 = vadd.xlane.f32.xlu0 %v1378
      %v1442 = vpop.xlane.xlu0 %1441
      %1443 = vadd.xlane.f32.xlu0 %v1380
      %v1444 = vpop.xlane.xlu0 %1443
      %1445 = vadd.xlane.f32.xlu0 %v1382
      %v1446 = vpop.xlane.xlu0 %1445
      %v1447 = vrcp.pop %v1384
      %v1448 = vrcp.pop %v1386
      %v1449 = vrcp.pop %v1388
      %v1450 = vrcp.pop %v1390
      %v1451 = vrcp.pop %v1392
      %v1452 = vrcp.pop %v1394
      %v1453 = vrcp.pop %v1396
      %v1454 = vrcp.pop %v1398
      %v1455 = vrcp.pop %v1400
      %v1456 = vrcp.pop %v1402
      %v1457 = vrcp.pop %v1404
      %v1458 = vrcp.pop %v1406
      %v1459 = vrcp.pop %v1408
      %v1460 = vrcp.pop %v1410
      %v1461 = vrcp.pop %v1412
      %v1462 = vrcp.pop %v1414
      %v1463 = vrcp.pop %v1416
      %v1464 = vrcp.pop %v1418
      %v1465 = vrcp.pop %v1420
      %v1466 = vrcp.pop %v1422
      %v1467 = vrcp.pop %v1424
      %v1468 = vrcp.pop %v1426
      %v1469 = vrcp.pop %v1428
      %v1470 = vrcp.pop %v1430
      %v1471 = vrcp.pop %v1432
      %v1472 = vrcp.pop %v1434
      %v1473 = vrcp.pop %v1436
      %v1474 = vrcp.pop %v1438
      %v1475 = vrcp.pop %v1440
      %v1476 = vrcp.pop %v1442
      %v1477 = vrcp.pop %v1444
      %v1478 = vrcp.pop %v1446
      %v1479 = vmul.f32 %v1320, %v1447
      %v1480 = vmul.f32 %v1322, %v1448
      %v1481 = vmul.f32 %v1324, %v1449
      %v1482 = vmul.f32 %v1326, %v1450
      %v1483 = vmul.f32 %v1328, %v1451
      %v1484 = vmul.f32 %v1330, %v1452
      %v1485 = vmul.f32 %v1332, %v1453
      %v1486 = vmul.f32 %v1334, %v1454
      %v1487 = vmul.f32 %v1336, %v1455
      %v1488 = vmul.f32 %v1338, %v1456
      %v1489 = vmul.f32 %v1340, %v1457
      %v1490 = vmul.f32 %v1342, %v1458
      %v1491 = vmul.f32 %v1344, %v1459
      %v1492 = vmul.f32 %v1346, %v1460
      %v1493 = vmul.f32 %v1348, %v1461
      %v1494 = vmul.f32 %v1350, %v1462
      %v1495 = vmul.f32 %v1352, %v1463
      %v1496 = vmul.f32 %v1354, %v1464
      %v1497 = vmul.f32 %v1356, %v1465
      %v1498 = vmul.f32 %v1358, %v1466
      %v1499 = vmul.f32 %v1360, %v1467
      %v1500 = vmul.f32 %v1362, %v1468
      %v1501 = vmul.f32 %v1364, %v1469
      %v1502 = vmul.f32 %v1366, %v1470
      %v1503 = vmul.f32 %v1368, %v1471
      %v1504 = vmul.f32 %v1370, %v1472
      %v1505 = vmul.f32 %v1372, %v1473
      %v1506 = vmul.f32 %v1374, %v1474
      %v1507 = vmul.f32 %v1376, %v1475
      %v1508 = vmul.f32 %v1378, %v1476
      %v1509 = vmul.f32 %v1380, %v1477
      %v1510 = vmul.f32 %v1382, %v1478
      %1511 = vst [vmem:[%s280] sm:$0xff] %v1479
      %1512 = vst [vmem:[%s280 + $0x8] sm:$0xff] %v1480
      %1513 = vst [vmem:[%s280 + $0x10] sm:$0xff] %v1481
      %1514 = vst [vmem:[%s280 + $0x18] sm:$0xff] %v1482
      %1515 = vst [vmem:[%s280 + $0x20] sm:$0xff] %v1483
      %1516 = vst [vmem:[%s280 + $0x28] sm:$0xff] %v1484
      %1517 = vst [vmem:[%s280 + $0x30] sm:$0xff] %v1485
      %1518 = vst [vmem:[%s280 + $0x38] sm:$0xff] %v1486
      %1519 = vst [vmem:[%s280 + $0x40] sm:$0xff] %v1487
      %1520 = vst [vmem:[%s280 + $0x48] sm:$0xff] %v1488
      %1521 = vst [vmem:[%s280 + $0x50] sm:$0xff] %v1489
      %1522 = vst [vmem:[%s280 + $0x58] sm:$0xff] %v1490
      %1523 = vst [vmem:[%s280 + $0x60] sm:$0xff] %v1491
      %1524 = vst [vmem:[%s280 + $0x68] sm:$0xff] %v1492
      %1525 = vst [vmem:[%s280 + $0x70] sm:$0xff] %v1493
      %1526 = vst [vmem:[%s280 + $0x78] sm:$0xff] %v1494
      %1527 = vst [vmem:[%s280 + $0x80] sm:$0xff] %v1495
      %1528 = vst [vmem:[%s280 + $0x88] sm:$0xff] %v1496
      %1529 = vst [vmem:[%s280 + $0x90] sm:$0xff] %v1497
      %1530 = vst [vmem:[%s280 + $0x98] sm:$0xff] %v1498
      %1531 = vst [vmem:[%s280 + $0xa0] sm:$0xff] %v1499
      %1532 = vst [vmem:[%s280 + $0xa8] sm:$0xff] %v1500
      %1533 = vst [vmem:[%s280 + $0xb0] sm:$0xff] %v1501
      %1534 = vst [vmem:[%s280 + $0xb8] sm:$0xff] %v1502
      %1535 = vst [vmem:[%s280 + $0xc0] sm:$0xff] %v1503
      %1536 = vst [vmem:[%s280 + $0xc8] sm:$0xff] %v1504
      %1537 = vst [vmem:[%s280 + $0xd0] sm:$0xff] %v1505
      %1538 = vst [vmem:[%s280 + $0xd8] sm:$0xff] %v1506
      %1539 = vst [vmem:[%s280 + $0xe0] sm:$0xff] %v1507
      %1540 = vst [vmem:[%s280 + $0xe8] sm:$0xff] %v1508
      %1541 = vst [vmem:[%s280 + $0xf0] sm:$0xff] %v1509
      %1542 = vst [vmem:[%s280 + $0xf8] sm:$0xff] %v1510
      %s1543 = smul.u32 32, %s18
      %p1544 = scmp.lt.s32.totalorder %s1543, 63
      %s1545 = scalar_select %p1544, %s1543, 63
      %s1546 = smul.addr %s1545, 8
      %s1547 = scalar_lea.vmem %s7, %s1546
      // Predicated region
      $region49: #{mlp_forward.1} parent=47 // pred_check
        %p1548 = pneg %p188
      $region50: #{mlp_forward.1} parent=47 // pred_check_branch
        %1550 = sbr.rel (%p1548) target = $region52
      $region51: #{mlp_forward.1} parent=47 // pred_region
        %s1551 = smul.u32 32, %s18
      $region52: #{mlp_forward.1} parent=47 // pred_fallthru
        _
    $region48: #{mlp_forward.1} parent=5 // pred_fallthru
      _
    %p1552 = scmp.le.s32.totalorder 2, %s13
    // Predicated region
    $region53: #{mlp_forward.1} parent=5 // pred_check
      %p1553 = pneg %p1552
    $region54: #{mlp_forward.1} parent=5 // pred_check_branch
      %1555 = sbr.rel (%p1553) target = $region56
    $region55: #{mlp_forward.1} parent=5 // pred_region
      %s1556 = ssub.s32 %s13, 2
      // Predicated region
      $region57: #{mlp_forward.1} parent=55 // pred_check
        %p1557 = pneg %p194
      $region58: #{mlp_forward.1} parent=55 // pred_check_branch
        %1559 = sbr.rel (%p1557) target = $region60
      $region59: #{mlp_forward.1} parent=55 // pred_region
        %s1560 = smul.u32 32, %s19
        %p1561 = scmp.lt.s32.totalorder %s1560, 63
        %s1562 = scalar_select %p1561, %s1560, 63
        %s1563 = smul.addr %s1562, 8
        %s1564 = scalar_lea.vmem %s7, %s1563
      $region60: #{mlp_forward.1} parent=55 // pred_fallthru
        _
    $region56: #{mlp_forward.1} parent=5 // pred_fallthru
      _
  $region6: #{mlp_forward.1} parent=0 // loop_footer
    %s17 = sadd.s32 1, %s13
  $region7: #{mlp_forward.1} parent=0 // loop_footer_branch
    %12 = sbr.rel target = $region3
  $region8: #{mlp_forward.1} parent=0 // loop_exit
    _

</llo_original>
